<compile_context>
chip_gen: v7x
topology: tpu7x:2x2x1
jax: 0.10.0
libtpu: 0.0.40
codegen_flags: <defaults>
</compile_context>

<pallas_src>
import functools

import jax
import jax.numpy as jnp
from jax.experimental import pallas as pl
from jax.experimental.pallas import tpu as pltpu


def _layernorm(y, gamma, beta, eps=1e-5):
    mu = jnp.mean(y, axis=-1, keepdims=True)
    var = jnp.mean((y - mu) ** 2, axis=-1, keepdims=True)
    return (y - mu) * jax.lax.rsqrt(var + eps) * gamma + beta


def _vmem_limit_bytes():
    """Generation-aware scoped-VMEM budget: ~85% of physical, capped at 112 MiB."""
    try:
        cap = pltpu.get_tpu_info().vmem_capacity_bytes
        return int(min(cap * 0.85, 112 * 1024 * 1024))
    except Exception:
        return 32 * 1024 * 1024   # conservative fallback


def encoder_layer_kernel(
    # inputs
    x_ref,        # (1, S, D)   f32   activation (resident across q-tiles of one b)
    wqkv_ref,     # (D, 3D)     bf16  fused q/k/v in-proj (in,out); q cols pre-scaled
    bqkv_ref,     # (1, 3D)     f32   fused q/k/v bias; q part pre-scaled
    wo_ref,       # (D, D)      bf16  out-proj weight (in, out)
    bo_ref,       # (1, D)      f32
    w1_ref,       # (D, F)      bf16  FFN-1 weight (in, out)
    b1_ref,       # (1, F)      f32
    w2_ref,       # (F, D)      bf16  FFN-2 weight (in, out)
    b2_ref,       # (1, D)      f32
    g1_ref, be1_ref, g2_ref, be2_ref,   # (1, D) f32  LayerNorm params
    # outputs
    out_ref,      # (1, TQ, D)  f32
    # [attn_ref]  # (1, TQ, S)  f32   head-averaged attention (optional)
    # scratch
    *rest,
    nhead, d_head, tq, return_attn,
):
    if return_attn:
        attn_ref, qkv_scr, ctx_scr = rest
    else:
        attn_ref = None
        qkv_scr, ctx_scr = rest

    qt = pl.program_id(1)
    D = x_ref.shape[2]
    Dh = d_head

    # ---- once per batch element: full-sequence fused QKV projection --------
    # One big (S,D)@(D,3D) matmul (full MXU width), x cast to bf16 exactly once.
    @pl.when(qt == 0)
    def _():
        x_full = x_ref[0].astype(jnp.bfloat16)                         # (S, D)
        qkv = jnp.dot(x_full, wqkv_ref[...],
                      preferred_element_type=jnp.float32) + bqkv_ref[...]
        qkv_scr[...] = qkv.astype(jnp.bfloat16)                        # (S, 3D)

    q_start = pl.multiple_of(qt * tq, tq)
    x_tile = x_ref[0, pl.ds(q_start, tq), :]                           # (TQ, D) f32
    q_tile = qkv_scr[pl.ds(q_start, tq), :]                            # (TQ, 3D) bf16

    # ---- per-head attention for this query tile (exact full-row softmax) ---
    attn_acc = None
    for h in range(nhead):
        q_h = q_tile[:, h * Dh:(h + 1) * Dh]                           # (TQ, Dh) bf16
        k_h = qkv_scr[:, D + h * Dh: D + (h + 1) * Dh]                 # (S, Dh)  bf16
        v_h = qkv_scr[:, 2 * D + h * Dh: 2 * D + (h + 1) * Dh]         # (S, Dh)  bf16

        s = jnp.einsum('qe,ke->qk', q_h, k_h,
                       preferred_element_type=jnp.float32)             # (TQ, S) f32
        s = s - jnp.max(s, axis=-1, keepdims=True)
        p = jnp.exp(s)
        p = p / jnp.sum(p, axis=-1, keepdims=True)                     # exact rows=1

        if return_attn:
            attn_acc = p if attn_acc is None else attn_acc + p

        ctx_h = jnp.dot(p.astype(jnp.bfloat16), v_h,
                        preferred_element_type=jnp.float32)            # (TQ, Dh) f32
        ctx_scr[:, h * Dh:(h + 1) * Dh] = ctx_h                        # head-concat

    # ---- out-projection (full D contraction), residual+norm1, FFN, norm2 ---
    src2 = jnp.dot(ctx_scr[...].astype(jnp.bfloat16), wo_ref[...],
                   preferred_element_type=jnp.float32) + bo_ref[...]
    y1 = _layernorm(x_tile + src2, g1_ref[...], be1_ref[...])
    h1 = jnp.dot(y1.astype(jnp.bfloat16), w1_ref[...],
                 preferred_element_type=jnp.float32) + b1_ref[...]
    h1 = jnp.maximum(h1, 0.0)
    ffn = jnp.dot(h1.astype(jnp.bfloat16), w2_ref[...],
                  preferred_element_type=jnp.float32) + b2_ref[...]
    y2 = _layernorm(y1 + ffn, g2_ref[...], be2_ref[...])

    out_ref[0] = y2.astype(out_ref.dtype)
    if return_attn:
        attn_ref[0] = (attn_acc * (1.0 / nhead)).astype(attn_ref.dtype)


def self_attn_layer(x, params, nhead, *, return_attn=True):
    """x: (B, S, D) float32 (batch-first, as SelfAttnLayer.forward receives it).

    Returns (out (B,S,D) f32, attn (B,S,S) f32 head-averaged) — attn is None if
    return_attn=False (PyTorch's encoder layer usually runs need_weights=False,
    in which case the (B,S,S) HBM stream is dead weight and can be dropped)."""
    B, S, D = x.shape
    H = nhead
    Dh = D // H
    F = params['w1'].shape[0]

    # Query-tile size: bounds score/softmax blocks to (TQ, S) instead of (S, S).
    tq = 128 if S % 128 == 0 else S
    nqt = S // tq

    # ---- one-time host-side weight packing ----
    # PyTorch Linear: y = x @ W.T + b, W stored (out, in).  Pre-transpose to
    # (in, out), fuse q/k/v into one (D, 3D) matrix, fold 1/sqrt(Dh) into the
    # q columns/bias (in f32, before the bf16 cast), cast MXU operands to bf16.
    scale = 1.0 / float(Dh) ** 0.5
    wqkv_t = jnp.concatenate(
        [(params['wq'] * scale).T, params['wk'].T, params['wv'].T],
        axis=1).astype(jnp.bfloat16)                                   # (D, 3D)
    bqkv = jnp.concatenate(
        [params['bq'].reshape(1, D) * scale,
         params['bk'].reshape(1, D),
         params['bv'].reshape(1, D)], axis=1)                          # (1, 3D) f32
    wo_t = params['wo'].T.astype(jnp.bfloat16)                         # (D, D)
    w1_t = params['w1'].T.astype(jnp.bfloat16)                         # (D, F)
    w2_t = params['w2'].T.astype(jnp.bfloat16)                         # (F, D)

    resident = lambda shape: pl.BlockSpec(shape, lambda b, q: (0, 0))

    out_shape = [jax.ShapeDtypeStruct((B, S, D), jnp.float32)]
    out_specs = [pl.BlockSpec((1, tq, D), lambda b, q: (b, q, 0))]
    if return_attn:
        out_shape.append(jax.ShapeDtypeStruct((B, S, S), jnp.float32))
        out_specs.append(pl.BlockSpec((1, tq, S), lambda b, q: (b, q, 0)))

    result = pl.pallas_call(
        functools.partial(encoder_layer_kernel, nhead=H, d_head=Dh, tq=tq,
                          return_attn=return_attn),
        out_shape=tuple(out_shape),
        grid=(B, nqt),
        in_specs=[
            pl.BlockSpec((1, S, D), lambda b, q: (b, 0, 0)),  # x, resident over q
            resident((D, 3 * D)),                             # fused q/k/v weight
            resident((1, 3 * D)),                             # fused q/k/v bias
            resident((D, D)),                                 # wo_t
            resident((1, D)),                                 # bo
            resident((D, F)),                                 # w1_t
            resident((1, F)),                                 # b1
            resident((F, D)),                                 # w2_t
            resident((1, D)),                                 # b2
            resident((1, D)), resident((1, D)),               # g1, be1
            resident((1, D)), resident((1, D)),               # g2, be2
        ],
        out_specs=tuple(out_specs),
        scratch_shapes=[
            pltpu.VMEM((S, 3 * D), jnp.bfloat16),   # fused q/k/v; persists over q-tiles
            pltpu.VMEM((tq, D), jnp.float32),       # per-tile head-concat context
        ],
        compiler_params=pltpu.CompilerParams(
            # B independent -> "parallel" (sharded across v7x's 2 TensorCores);
            # q-tile axis carries the per-batch KV scratch -> "arbitrary".
            dimension_semantics=("parallel", "arbitrary"),
            vmem_limit_bytes=_vmem_limit_bytes(),
        ),
    )(x, wqkv_t, bqkv, wo_t, params['bo'], w1_t, params['b1'], w2_t,
      params['b2'], params['g1'], params['be1'], params['g2'], params['be2'])

    if return_attn:
        return result
    return result[0], None


def init_params(key, d_model, nhead, dim_feedforward):
    ks = jax.random.split(key, 8)

    def uni(k, shape, bound):
        return jax.random.uniform(k, shape, jnp.float32, -bound, bound)

    b_d = 1.0 / d_model ** 0.5
    b_f = 1.0 / dim_feedforward ** 0.5

    in_proj_w = uni(ks[0], (3 * d_model, d_model), b_d)
    in_proj_b = uni(ks[1], (3 * d_model,), b_d)
    return {
        'wq': in_proj_w[0 * d_model:1 * d_model],
        'wk': in_proj_w[1 * d_model:2 * d_model],
        'wv': in_proj_w[2 * d_model:3 * d_model],
        'bq': in_proj_b[0 * d_model:1 * d_model].reshape(1, d_model),
        'bk': in_proj_b[1 * d_model:2 * d_model].reshape(1, d_model),
        'bv': in_proj_b[2 * d_model:3 * d_model].reshape(1, d_model),
        'wo': uni(ks[2], (d_model, d_model), b_d),
        'bo': uni(ks[3], (1, d_model), b_d),
        'w1': uni(ks[4], (dim_feedforward, d_model), b_d),
        'b1': uni(ks[5], (1, dim_feedforward), b_d),
        'w2': uni(ks[6], (d_model, dim_feedforward), b_f),
        'b2': uni(ks[7], (1, d_model), b_f),
        'g1': jnp.ones((1, d_model), jnp.float32),
        'be1': jnp.zeros((1, d_model), jnp.float32),
        'g2': jnp.ones((1, d_model), jnp.float32),
        'be2': jnp.zeros((1, d_model), jnp.float32),
    }


def ref_forward(x, p, nhead):
    """Pure-JAX f32 reference (eval-mode PyTorch semantics, batch-first)."""
    B, S, D = x.shape
    H, Dh = nhead, D // nhead
    q = x @ p['wq'].T + p['bq']
    k = x @ p['wk'].T + p['bk']
    v = x @ p['wv'].T + p['bv']
    qh = q.reshape(B, S, H, Dh).transpose(0, 2, 1, 3) / Dh ** 0.5
    kh = k.reshape(B, S, H, Dh).transpose(0, 2, 1, 3)
    vh = v.reshape(B, S, H, Dh).transpose(0, 2, 1, 3)
    s = jnp.einsum('bhqe,bhke->bhqk', qh, kh)
    pw = jax.nn.softmax(s, axis=-1)
    ctx = jnp.einsum('bhqk,bhke->bhqe', pw, vh).transpose(0, 2, 1, 3).reshape(B, S, D)
    src2 = ctx @ p['wo'].T + p['bo']

    def ln(y, g, b):
        mu = jnp.mean(y, -1, keepdims=True)
        var = jnp.mean((y - mu) ** 2, -1, keepdims=True)
        return (y - mu) / jnp.sqrt(var + 1e-5) * g + b

    y1 = ln(x + src2, p['g1'], p['be1'])
    ffn = jnp.maximum(y1 @ p['w1'].T + p['b1'], 0.0) @ p['w2'].T + p['b2']
    y2 = ln(y1 + ffn, p['g2'], p['be2'])
    return y2, jnp.mean(pw, axis=1)


if __name__ == "__main__":
    B, S, D = 2, 8, 32
    NHEAD = 4
    FF = D * 1          # SelfAttnLayer uses dim_feedforward = d_model * 1

    key = jax.random.PRNGKey(0)
    k_in, k_par = jax.random.split(key)
    x = jax.random.normal(k_in, (B, S, D), jnp.float32)
    params = init_params(k_par, D, NHEAD, FF)

    out, attn = self_attn_layer(x, params, NHEAD, return_attn=True)
    out = jax.block_until_ready(out)
    attn = jax.block_until_ready(attn)

    ref_out, ref_attn = ref_forward(x, params, NHEAD)
    assert out.shape == (B, S, D) and attn.shape == (B, S, S)
    # bf16 MXU operands with f32 accumulation -> compare vs f32 ref with bf16-level tol
    assert jnp.allclose(out, ref_out, atol=2e-2, rtol=2e-2), \
        float(jnp.max(jnp.abs(out - ref_out)))
    assert jnp.allclose(attn, ref_attn, atol=1e-2, rtol=1e-2), \
        float(jnp.max(jnp.abs(attn - ref_attn)))

    print("KERNEL_OK")
</pallas_src>

<mosaic_0001>
module attributes {stable_mosaic.version = 11 : i64} {
  func.func @encoder_layer_kernel(%arg0: i32, %arg1: i32, %arg2: memref<1x8x32xf32, #tpu.memory_space<vmem>>, %arg3: memref<32x96xbf16, #tpu.memory_space<vmem>>, %arg4: memref<1x96xf32, #tpu.memory_space<vmem>>, %arg5: memref<32x32xbf16, #tpu.memory_space<vmem>>, %arg6: memref<1x32xf32, #tpu.memory_space<vmem>>, %arg7: memref<32x32xbf16, #tpu.memory_space<vmem>>, %arg8: memref<1x32xf32, #tpu.memory_space<vmem>>, %arg9: memref<32x32xbf16, #tpu.memory_space<vmem>>, %arg10: memref<1x32xf32, #tpu.memory_space<vmem>>, %arg11: memref<1x32xf32, #tpu.memory_space<vmem>>, %arg12: memref<1x32xf32, #tpu.memory_space<vmem>>, %arg13: memref<1x32xf32, #tpu.memory_space<vmem>>, %arg14: memref<1x32xf32, #tpu.memory_space<vmem>>, %arg15: memref<1x8x32xf32, #tpu.memory_space<vmem>>, %arg16: memref<1x8x8xf32, #tpu.memory_space<vmem>>, %arg17: memref<8x96xbf16, #tpu.memory_space<vmem>>, %arg18: memref<8x32xf32, #tpu.memory_space<vmem>>) attributes {dimension_semantics = [#tpu.dimension_semantics<parallel>, #tpu.dimension_semantics<arbitrary>], iteration_bounds = array<i64: 2, 1>, scalar_prefetch = 0 : i64, scratch_operands = 2 : i64, tpu.core_type = #tpu.core_type<tc>, window_params = [{transform_indices = @transform_0, window_bounds = array<i64: 1, 8, 32>}, {pipeline_mode = #tpu.pipeline_mode<synchronous>, transform_indices = @transform_1, window_bounds = array<i64: 32, 96>}, {pipeline_mode = #tpu.pipeline_mode<synchronous>, transform_indices = @transform_2, window_bounds = array<i64: 1, 96>}, {pipeline_mode = #tpu.pipeline_mode<synchronous>, transform_indices = @transform_3, window_bounds = array<i64: 32, 32>}, {pipeline_mode = #tpu.pipeline_mode<synchronous>, transform_indices = @transform_4, window_bounds = array<i64: 1, 32>}, {pipeline_mode = #tpu.pipeline_mode<synchronous>, transform_indices = @transform_5, window_bounds = array<i64: 32, 32>}, {pipeline_mode = #tpu.pipeline_mode<synchronous>, transform_indices = @transform_6, window_bounds = array<i64: 1, 32>}, {pipeline_mode = #tpu.pipeline_mode<synchronous>, transform_indices = @transform_7, window_bounds = array<i64: 32, 32>}, {pipeline_mode = #tpu.pipeline_mode<synchronous>, transform_indices = @transform_8, window_bounds = array<i64: 1, 32>}, {pipeline_mode = #tpu.pipeline_mode<synchronous>, transform_indices = @transform_9, window_bounds = array<i64: 1, 32>}, {pipeline_mode = #tpu.pipeline_mode<synchronous>, transform_indices = @transform_10, window_bounds = array<i64: 1, 32>}, {pipeline_mode = #tpu.pipeline_mode<synchronous>, transform_indices = @transform_11, window_bounds = array<i64: 1, 32>}, {pipeline_mode = #tpu.pipeline_mode<synchronous>, transform_indices = @transform_12, window_bounds = array<i64: 1, 32>}, {transform_indices = @transform_13, window_bounds = array<i64: 1, 8, 32>}, {transform_indices = @transform_14, window_bounds = array<i64: 1, 8, 8>}]} {
    %c0_i32 = arith.constant 0 : i32
    %0 = arith.cmpi eq, %arg1, %c0_i32 : i32
    %1 = arith.extui %0 : i1 to i32
    %c0_i32_0 = arith.constant 0 : i32
    %2 = arith.cmpi ne, %1, %c0_i32_0 : i32
    scf.if %2 {
      %c0_74 = arith.constant 0 : index
      %c0_75 = arith.constant 0 : index
      %c0_76 = arith.constant 0 : index
      %156 = vector.load %arg2[%c0_74, %c0_75, %c0_76] : memref<1x8x32xf32, #tpu.memory_space<vmem>>, vector<1x8x32xf32>
      %157 = vector.shape_cast %156 : vector<1x8x32xf32> to vector<8x32xf32>
      %158 = arith.truncf %157 : vector<8x32xf32> to vector<8x32xbf16>
      %c0_77 = arith.constant 0 : index
      %c0_78 = arith.constant 0 : index
      %159 = vector.load %arg3[%c0_77, %c0_78] : memref<32x96xbf16, #tpu.memory_space<vmem>>, vector<32x96xbf16>
      %cst_79 = arith.constant dense<0.000000e+00> : vector<8x96xf32>
      %160 = tpu.matmul %158, %159, %cst_79 {dimension_numbers = #tpu.dot_dimension_numbers<[1], [0], [0], [1], [0, 0, 1, 1], [], []>} : vector<8x32xbf16>, vector<32x96xbf16>, vector<8x96xf32> -> vector<8x96xf32>
      %c0_80 = arith.constant 0 : index
      %c0_81 = arith.constant 0 : index
      %161 = vector.load %arg4[%c0_80, %c0_81] : memref<1x96xf32, #tpu.memory_space<vmem>>, vector<1x96xf32>
      %162 = vector.broadcast %161 : vector<1x96xf32> to vector<8x96xf32>
      %163 = arith.addf %160, %162 : vector<8x96xf32>
      %164 = arith.truncf %163 : vector<8x96xf32> to vector<8x96xbf16>
      %c0_82 = arith.constant 0 : index
      %c0_83 = arith.constant 0 : index
      %165 = vector.load %arg17[%c0_82, %c0_83] : memref<8x96xbf16, #tpu.memory_space<vmem>>, vector<8x96xbf16>
      tpu.vector_store %arg17[%c0_82, %c0_83], %164 {strides = array<i32>} : memref<8x96xbf16, #tpu.memory_space<vmem>>, vector<8x96xbf16>,
    } else {
    }
    %c8_i32 = arith.constant 8 : i32
    %3 = arith.muli %arg1, %c8_i32 : i32
    %4 = tpu.assume_multiple %3, 8 : i32
    %c0 = arith.constant 0 : index
    %5 = arith.index_cast %4 : i32 to index
    %c0_1 = arith.constant 0 : index
    %6 = vector.load %arg2[%c0, %5, %c0_1] : memref<1x8x32xf32, #tpu.memory_space<vmem>>, vector<1x8x32xf32>
    %7 = vector.shape_cast %6 : vector<1x8x32xf32> to vector<8x32xf32>
    %8 = arith.index_cast %4 : i32 to index
    %c0_2 = arith.constant 0 : index
    %9 = vector.load %arg17[%8, %c0_2] : memref<8x96xbf16, #tpu.memory_space<vmem>>, vector<8x96xbf16>
    %10 = vector.extract_strided_slice %9 {offsets = [0, 0], sizes = [8, 8], strides = [1, 1]} : vector<8x96xbf16> to vector<8x8xbf16>
    %c0_3 = arith.constant 0 : index
    %c32 = arith.constant 32 : index
    %11 = vector.load %arg17[%c0_3, %c32] : memref<8x96xbf16, #tpu.memory_space<vmem>>, vector<8x8xbf16>
    %c0_4 = arith.constant 0 : index
    %c64 = arith.constant 64 : index
    %12 = vector.load %arg17[%c0_4, %c64] : memref<8x96xbf16, #tpu.memory_space<vmem>>, vector<8x8xbf16>
    "tpu.trace_start"() <{level = 10 : i32, message = "qe,ke->qk"}> : () -> ()
    %cst = arith.constant dense<0.000000e+00> : vector<8x8xf32>
    %13 = tpu.matmul %10, %11, %cst {dimension_numbers = #tpu.dot_dimension_numbers<[1], [1], [0], [0], [0, 0, 1, 0], [], []>} : vector<8x8xbf16>, vector<8x8xbf16>, vector<8x8xf32> -> vector<8x8xf32>
    "tpu.trace_stop"() : () -> ()
    %cst_5 = arith.constant dense<0xFF800000> : vector<8xf32>
    %14 = vector.multi_reduction <maximumf>, %13, %cst_5 [1] : vector<8x8xf32> to vector<8xf32>
    %15 = vector.shape_cast %14 : vector<8xf32> to vector<8x1xf32>
    %16 = vector.broadcast %15 : vector<8x1xf32> to vector<8x8xf32>
    %17 = arith.subf %13, %16 : vector<8x8xf32>
    %18 = math.exp %17 : vector<8x8xf32>
    %cst_6 = arith.constant dense<0.000000e+00> : vector<8xf32>
    %19 = vector.multi_reduction <add>, %18, %cst_6 [1] : vector<8x8xf32> to vector<8xf32>
    %20 = vector.shape_cast %19 : vector<8xf32> to vector<8x1xf32>
    %21 = vector.broadcast %20 : vector<8x1xf32> to vector<8x8xf32>
    %22 = arith.divf %18, %21 : vector<8x8xf32>
    %23 = arith.truncf %22 : vector<8x8xf32> to vector<8x8xbf16>
    %cst_7 = arith.constant dense<0.000000e+00> : vector<8x8xf32>
    %24 = tpu.matmul %23, %12, %cst_7 {dimension_numbers = #tpu.dot_dimension_numbers<[1], [0], [0], [1], [0, 0, 1, 1], [], []>} : vector<8x8xbf16>, vector<8x8xbf16>, vector<8x8xf32> -> vector<8x8xf32>
    %c0_8 = arith.constant 0 : index
    %c0_9 = arith.constant 0 : index
    %25 = vector.load %arg18[%c0_8, %c0_9] : memref<8x32xf32, #tpu.memory_space<vmem>>, vector<8x8xf32>
    tpu.vector_store %arg18[%c0_8, %c0_9], %24 {strides = array<i32>} : memref<8x32xf32, #tpu.memory_space<vmem>>, vector<8x8xf32>,
    %26 = vector.extract_strided_slice %9 {offsets = [0, 8], sizes = [8, 8], strides = [1, 1]} : vector<8x96xbf16> to vector<8x8xbf16>
    %c0_10 = arith.constant 0 : index
    %c40 = arith.constant 40 : index
    %27 = vector.load %arg17[%c0_10, %c40] : memref<8x96xbf16, #tpu.memory_space<vmem>>, vector<8x8xbf16>
    %c0_11 = arith.constant 0 : index
    %c72 = arith.constant 72 : index
    %28 = vector.load %arg17[%c0_11, %c72] : memref<8x96xbf16, #tpu.memory_space<vmem>>, vector<8x8xbf16>
    "tpu.trace_start"() <{level = 10 : i32, message = "qe,ke->qk"}> : () -> ()
    %cst_12 = arith.constant dense<0.000000e+00> : vector<8x8xf32>
    %29 = tpu.matmul %26, %27, %cst_12 {dimension_numbers = #tpu.dot_dimension_numbers<[1], [1], [0], [0], [0, 0, 1, 0], [], []>} : vector<8x8xbf16>, vector<8x8xbf16>, vector<8x8xf32> -> vector<8x8xf32>
    "tpu.trace_stop"() : () -> ()
    %cst_13 = arith.constant dense<0xFF800000> : vector<8xf32>
    %30 = vector.multi_reduction <maximumf>, %29, %cst_13 [1] : vector<8x8xf32> to vector<8xf32>
    %31 = vector.shape_cast %30 : vector<8xf32> to vector<8x1xf32>
    %32 = vector.broadcast %31 : vector<8x1xf32> to vector<8x8xf32>
    %33 = arith.subf %29, %32 : vector<8x8xf32>
    %34 = math.exp %33 : vector<8x8xf32>
    %cst_14 = arith.constant dense<0.000000e+00> : vector<8xf32>
    %35 = vector.multi_reduction <add>, %34, %cst_14 [1] : vector<8x8xf32> to vector<8xf32>
    %36 = vector.shape_cast %35 : vector<8xf32> to vector<8x1xf32>
    %37 = vector.broadcast %36 : vector<8x1xf32> to vector<8x8xf32>
    %38 = arith.divf %34, %37 : vector<8x8xf32>
    %39 = arith.addf %22, %38 : vector<8x8xf32>
    %40 = arith.truncf %38 : vector<8x8xf32> to vector<8x8xbf16>
    %cst_15 = arith.constant dense<0.000000e+00> : vector<8x8xf32>
    %41 = tpu.matmul %40, %28, %cst_15 {dimension_numbers = #tpu.dot_dimension_numbers<[1], [0], [0], [1], [0, 0, 1, 1], [], []>} : vector<8x8xbf16>, vector<8x8xbf16>, vector<8x8xf32> -> vector<8x8xf32>
    %c0_16 = arith.constant 0 : index
    %c8 = arith.constant 8 : index
    %42 = vector.load %arg18[%c0_16, %c8] : memref<8x32xf32, #tpu.memory_space<vmem>>, vector<8x8xf32>
    tpu.vector_store %arg18[%c0_16, %c8], %41 {strides = array<i32>} : memref<8x32xf32, #tpu.memory_space<vmem>>, vector<8x8xf32>,
    %43 = vector.extract_strided_slice %9 {offsets = [0, 16], sizes = [8, 8], strides = [1, 1]} : vector<8x96xbf16> to vector<8x8xbf16>
    %c0_17 = arith.constant 0 : index
    %c48 = arith.constant 48 : index
    %44 = vector.load %arg17[%c0_17, %c48] : memref<8x96xbf16, #tpu.memory_space<vmem>>, vector<8x8xbf16>
    %c0_18 = arith.constant 0 : index
    %c80 = arith.constant 80 : index
    %45 = vector.load %arg17[%c0_18, %c80] : memref<8x96xbf16, #tpu.memory_space<vmem>>, vector<8x8xbf16>
    "tpu.trace_start"() <{level = 10 : i32, message = "qe,ke->qk"}> : () -> ()
    %cst_19 = arith.constant dense<0.000000e+00> : vector<8x8xf32>
    %46 = tpu.matmul %43, %44, %cst_19 {dimension_numbers = #tpu.dot_dimension_numbers<[1], [1], [0], [0], [0, 0, 1, 0], [], []>} : vector<8x8xbf16>, vector<8x8xbf16>, vector<8x8xf32> -> vector<8x8xf32>
    "tpu.trace_stop"() : () -> ()
    %cst_20 = arith.constant dense<0xFF800000> : vector<8xf32>
    %47 = vector.multi_reduction <maximumf>, %46, %cst_20 [1] : vector<8x8xf32> to vector<8xf32>
    %48 = vector.shape_cast %47 : vector<8xf32> to vector<8x1xf32>
    %49 = vector.broadcast %48 : vector<8x1xf32> to vector<8x8xf32>
    %50 = arith.subf %46, %49 : vector<8x8xf32>
    %51 = math.exp %50 : vector<8x8xf32>
    %cst_21 = arith.constant dense<0.000000e+00> : vector<8xf32>
    %52 = vector.multi_reduction <add>, %51, %cst_21 [1] : vector<8x8xf32> to vector<8xf32>
    %53 = vector.shape_cast %52 : vector<8xf32> to vector<8x1xf32>
    %54 = vector.broadcast %53 : vector<8x1xf32> to vector<8x8xf32>
    %55 = arith.divf %51, %54 : vector<8x8xf32>
    %56 = arith.addf %39, %55 : vector<8x8xf32>
    %57 = arith.truncf %55 : vector<8x8xf32> to vector<8x8xbf16>
    %cst_22 = arith.constant dense<0.000000e+00> : vector<8x8xf32>
    %58 = tpu.matmul %57, %45, %cst_22 {dimension_numbers = #tpu.dot_dimension_numbers<[1], [0], [0], [1], [0, 0, 1, 1], [], []>} : vector<8x8xbf16>, vector<8x8xbf16>, vector<8x8xf32> -> vector<8x8xf32>
    %c0_23 = arith.constant 0 : index
    %c16 = arith.constant 16 : index
    %59 = vector.load %arg18[%c0_23, %c16] : memref<8x32xf32, #tpu.memory_space<vmem>>, vector<8x8xf32>
    tpu.vector_store %arg18[%c0_23, %c16], %58 {strides = array<i32>} : memref<8x32xf32, #tpu.memory_space<vmem>>, vector<8x8xf32>,
    %60 = vector.extract_strided_slice %9 {offsets = [0, 24], sizes = [8, 8], strides = [1, 1]} : vector<8x96xbf16> to vector<8x8xbf16>
    %c0_24 = arith.constant 0 : index
    %c56 = arith.constant 56 : index
    %61 = vector.load %arg17[%c0_24, %c56] : memref<8x96xbf16, #tpu.memory_space<vmem>>, vector<8x8xbf16>
    %c0_25 = arith.constant 0 : index
    %c88 = arith.constant 88 : index
    %62 = vector.load %arg17[%c0_25, %c88] : memref<8x96xbf16, #tpu.memory_space<vmem>>, vector<8x8xbf16>
    "tpu.trace_start"() <{level = 10 : i32, message = "qe,ke->qk"}> : () -> ()
    %cst_26 = arith.constant dense<0.000000e+00> : vector<8x8xf32>
    %63 = tpu.matmul %60, %61, %cst_26 {dimension_numbers = #tpu.dot_dimension_numbers<[1], [1], [0], [0], [0, 0, 1, 0], [], []>} : vector<8x8xbf16>, vector<8x8xbf16>, vector<8x8xf32> -> vector<8x8xf32>
    "tpu.trace_stop"() : () -> ()
    %cst_27 = arith.constant dense<0xFF800000> : vector<8xf32>
    %64 = vector.multi_reduction <maximumf>, %63, %cst_27 [1] : vector<8x8xf32> to vector<8xf32>
    %65 = vector.shape_cast %64 : vector<8xf32> to vector<8x1xf32>
    %66 = vector.broadcast %65 : vector<8x1xf32> to vector<8x8xf32>
    %67 = arith.subf %63, %66 : vector<8x8xf32>
    %68 = math.exp %67 : vector<8x8xf32>
    %cst_28 = arith.constant dense<0.000000e+00> : vector<8xf32>
    %69 = vector.multi_reduction <add>, %68, %cst_28 [1] : vector<8x8xf32> to vector<8xf32>
    %70 = vector.shape_cast %69 : vector<8xf32> to vector<8x1xf32>
    %71 = vector.broadcast %70 : vector<8x1xf32> to vector<8x8xf32>
    %72 = arith.divf %68, %71 : vector<8x8xf32>
    %73 = arith.addf %56, %72 : vector<8x8xf32>
    %74 = arith.truncf %72 : vector<8x8xf32> to vector<8x8xbf16>
    %cst_29 = arith.constant dense<0.000000e+00> : vector<8x8xf32>
    %75 = tpu.matmul %74, %62, %cst_29 {dimension_numbers = #tpu.dot_dimension_numbers<[1], [0], [0], [1], [0, 0, 1, 1], [], []>} : vector<8x8xbf16>, vector<8x8xbf16>, vector<8x8xf32> -> vector<8x8xf32>
    %c0_30 = arith.constant 0 : index
    %c24 = arith.constant 24 : index
    %76 = vector.load %arg18[%c0_30, %c24] : memref<8x32xf32, #tpu.memory_space<vmem>>, vector<8x8xf32>
    tpu.vector_store %arg18[%c0_30, %c24], %75 {strides = array<i32>} : memref<8x32xf32, #tpu.memory_space<vmem>>, vector<8x8xf32>,
    %c0_31 = arith.constant 0 : index
    %c0_32 = arith.constant 0 : index
    %77 = vector.load %arg18[%c0_31, %c0_32] : memref<8x32xf32, #tpu.memory_space<vmem>>, vector<8x32xf32>
    %78 = arith.truncf %77 : vector<8x32xf32> to vector<8x32xbf16>
    %c0_33 = arith.constant 0 : index
    %c0_34 = arith.constant 0 : index
    %79 = vector.load %arg5[%c0_33, %c0_34] : memref<32x32xbf16, #tpu.memory_space<vmem>>, vector<32x32xbf16>
    %cst_35 = arith.constant dense<0.000000e+00> : vector<8x32xf32>
    %80 = tpu.matmul %78, %79, %cst_35 {dimension_numbers = #tpu.dot_dimension_numbers<[1], [0], [0], [1], [0, 0, 1, 1], [], []>} : vector<8x32xbf16>, vector<32x32xbf16>, vector<8x32xf32> -> vector<8x32xf32>
    %c0_36 = arith.constant 0 : index
    %c0_37 = arith.constant 0 : index
    %81 = vector.load %arg6[%c0_36, %c0_37] : memref<1x32xf32, #tpu.memory_space<vmem>>, vector<1x32xf32>
    %82 = vector.broadcast %81 : vector<1x32xf32> to vector<8x32xf32>
    %83 = arith.addf %80, %82 : vector<8x32xf32>
    %84 = arith.addf %7, %83 : vector<8x32xf32>
    %c0_38 = arith.constant 0 : index
    %c0_39 = arith.constant 0 : index
    %85 = vector.load %arg11[%c0_38, %c0_39] : memref<1x32xf32, #tpu.memory_space<vmem>>, vector<1x32xf32>
    %c0_40 = arith.constant 0 : index
    %c0_41 = arith.constant 0 : index
    %86 = vector.load %arg12[%c0_40, %c0_41] : memref<1x32xf32, #tpu.memory_space<vmem>>, vector<1x32xf32>
    %cst_42 = arith.constant dense<0.000000e+00> : vector<8xf32>
    %87 = vector.multi_reduction <add>, %84, %cst_42 [1] : vector<8x32xf32> to vector<8xf32>
    %88 = vector.shape_cast %87 : vector<8xf32> to vector<8x1xf32>
    %cst_43 = arith.constant 3.200000e+01 : f32
    %89 = vector.broadcast %cst_43 : f32 to vector<8x1xf32>
    %90 = arith.divf %88, %89 : vector<8x1xf32>
    %91 = vector.broadcast %90 : vector<8x1xf32> to vector<8x32xf32>
    %92 = arith.subf %84, %91 : vector<8x32xf32>
    %93 = arith.mulf %92, %92 : vector<8x32xf32>
    %cst_44 = arith.constant dense<0.000000e+00> : vector<8xf32>
    %94 = vector.multi_reduction <add>, %93, %cst_44 [1] : vector<8x32xf32> to vector<8xf32>
    %95 = vector.shape_cast %94 : vector<8xf32> to vector<8x1xf32>
    %cst_45 = arith.constant 3.200000e+01 : f32
    %96 = vector.broadcast %cst_45 : f32 to vector<8x1xf32>
    %97 = arith.divf %95, %96 : vector<8x1xf32>
    %98 = vector.broadcast %90 : vector<8x1xf32> to vector<8x32xf32>
    %99 = arith.subf %84, %98 : vector<8x32xf32>
    %cst_46 = arith.constant 9.99999974E-6 : f32
    %100 = vector.broadcast %cst_46 : f32 to vector<8x1xf32>
    %101 = arith.addf %97, %100 : vector<8x1xf32>
    %102 = math.rsqrt %101 : vector<8x1xf32>
    %103 = vector.broadcast %102 : vector<8x1xf32> to vector<8x32xf32>
    %104 = arith.mulf %99, %103 : vector<8x32xf32>
    %105 = vector.broadcast %85 : vector<1x32xf32> to vector<8x32xf32>
    %106 = arith.mulf %104, %105 : vector<8x32xf32>
    %107 = vector.broadcast %86 : vector<1x32xf32> to vector<8x32xf32>
    %108 = arith.addf %106, %107 : vector<8x32xf32>
    %109 = arith.truncf %108 : vector<8x32xf32> to vector<8x32xbf16>
    %c0_47 = arith.constant 0 : index
    %c0_48 = arith.constant 0 : index
    %110 = vector.load %arg7[%c0_47, %c0_48] : memref<32x32xbf16, #tpu.memory_space<vmem>>, vector<32x32xbf16>
    %cst_49 = arith.constant dense<0.000000e+00> : vector<8x32xf32>
    %111 = tpu.matmul %109, %110, %cst_49 {dimension_numbers = #tpu.dot_dimension_numbers<[1], [0], [0], [1], [0, 0, 1, 1], [], []>} : vector<8x32xbf16>, vector<32x32xbf16>, vector<8x32xf32> -> vector<8x32xf32>
    %c0_50 = arith.constant 0 : index
    %c0_51 = arith.constant 0 : index
    %112 = vector.load %arg8[%c0_50, %c0_51] : memref<1x32xf32, #tpu.memory_space<vmem>>, vector<1x32xf32>
    %113 = vector.broadcast %112 : vector<1x32xf32> to vector<8x32xf32>
    %114 = arith.addf %111, %113 : vector<8x32xf32>
    %cst_52 = arith.constant 0.000000e+00 : f32
    %115 = vector.broadcast %cst_52 : f32 to vector<8x32xf32>
    %116 = arith.maximumf %114, %115 : vector<8x32xf32>
    %117 = arith.truncf %116 : vector<8x32xf32> to vector<8x32xbf16>
    %c0_53 = arith.constant 0 : index
    %c0_54 = arith.constant 0 : index
    %118 = vector.load %arg9[%c0_53, %c0_54] : memref<32x32xbf16, #tpu.memory_space<vmem>>, vector<32x32xbf16>
    %cst_55 = arith.constant dense<0.000000e+00> : vector<8x32xf32>
    %119 = tpu.matmul %117, %118, %cst_55 {dimension_numbers = #tpu.dot_dimension_numbers<[1], [0], [0], [1], [0, 0, 1, 1], [], []>} : vector<8x32xbf16>, vector<32x32xbf16>, vector<8x32xf32> -> vector<8x32xf32>
    %c0_56 = arith.constant 0 : index
    %c0_57 = arith.constant 0 : index
    %120 = vector.load %arg10[%c0_56, %c0_57] : memref<1x32xf32, #tpu.memory_space<vmem>>, vector<1x32xf32>
    %121 = vector.broadcast %120 : vector<1x32xf32> to vector<8x32xf32>
    %122 = arith.addf %119, %121 : vector<8x32xf32>
    %123 = arith.addf %108, %122 : vector<8x32xf32>
    %c0_58 = arith.constant 0 : index
    %c0_59 = arith.constant 0 : index
    %124 = vector.load %arg13[%c0_58, %c0_59] : memref<1x32xf32, #tpu.memory_space<vmem>>, vector<1x32xf32>
    %c0_60 = arith.constant 0 : index
    %c0_61 = arith.constant 0 : index
    %125 = vector.load %arg14[%c0_60, %c0_61] : memref<1x32xf32, #tpu.memory_space<vmem>>, vector<1x32xf32>
    %cst_62 = arith.constant dense<0.000000e+00> : vector<8xf32>
    %126 = vector.multi_reduction <add>, %123, %cst_62 [1] : vector<8x32xf32> to vector<8xf32>
    %127 = vector.shape_cast %126 : vector<8xf32> to vector<8x1xf32>
    %cst_63 = arith.constant 3.200000e+01 : f32
    %128 = vector.broadcast %cst_63 : f32 to vector<8x1xf32>
    %129 = arith.divf %127, %128 : vector<8x1xf32>
    %130 = vector.broadcast %129 : vector<8x1xf32> to vector<8x32xf32>
    %131 = arith.subf %123, %130 : vector<8x32xf32>
    %132 = arith.mulf %131, %131 : vector<8x32xf32>
    %cst_64 = arith.constant dense<0.000000e+00> : vector<8xf32>
    %133 = vector.multi_reduction <add>, %132, %cst_64 [1] : vector<8x32xf32> to vector<8xf32>
    %134 = vector.shape_cast %133 : vector<8xf32> to vector<8x1xf32>
    %cst_65 = arith.constant 3.200000e+01 : f32
    %135 = vector.broadcast %cst_65 : f32 to vector<8x1xf32>
    %136 = arith.divf %134, %135 : vector<8x1xf32>
    %137 = vector.broadcast %129 : vector<8x1xf32> to vector<8x32xf32>
    %138 = arith.subf %123, %137 : vector<8x32xf32>
    %cst_66 = arith.constant 9.99999974E-6 : f32
    %139 = vector.broadcast %cst_66 : f32 to vector<8x1xf32>
    %140 = arith.addf %136, %139 : vector<8x1xf32>
    %141 = math.rsqrt %140 : vector<8x1xf32>
    %142 = vector.broadcast %141 : vector<8x1xf32> to vector<8x32xf32>
    %143 = arith.mulf %138, %142 : vector<8x32xf32>
    %144 = vector.broadcast %124 : vector<1x32xf32> to vector<8x32xf32>
    %145 = arith.mulf %143, %144 : vector<8x32xf32>
    %146 = vector.broadcast %125 : vector<1x32xf32> to vector<8x32xf32>
    %147 = arith.addf %145, %146 : vector<8x32xf32>
    %c0_67 = arith.constant 0 : index
    %c0_68 = arith.constant 0 : index
    %c0_69 = arith.constant 0 : index
    %148 = vector.load %arg15[%c0_67, %c0_68, %c0_69] : memref<1x8x32xf32, #tpu.memory_space<vmem>>, vector<1x8x32xf32>
    %149 = vector.shape_cast %148 : vector<1x8x32xf32> to vector<8x32xf32>
    %150 = vector.shape_cast %147 : vector<8x32xf32> to vector<1x8x32xf32>
    tpu.vector_store %arg15[%c0_67, %c0_68, %c0_69], %150 {strides = array<i32>} : memref<1x8x32xf32, #tpu.memory_space<vmem>>, vector<1x8x32xf32>,
    %cst_70 = arith.constant 2.500000e-01 : f32
    %151 = vector.broadcast %cst_70 : f32 to vector<8x8xf32>
    %152 = arith.mulf %73, %151 : vector<8x8xf32>
    %c0_71 = arith.constant 0 : index
    %c0_72 = arith.constant 0 : index
    %c0_73 = arith.constant 0 : index
    %153 = vector.load %arg16[%c0_71, %c0_72, %c0_73] : memref<1x8x8xf32, #tpu.memory_space<vmem>>, vector<1x8x8xf32>
    %154 = vector.shape_cast %153 : vector<1x8x8xf32> to vector<8x8xf32>
    %155 = vector.shape_cast %152 : vector<8x8xf32> to vector<1x8x8xf32>
    tpu.vector_store %arg16[%c0_71, %c0_72, %c0_73], %155 {strides = array<i32>} : memref<1x8x8xf32, #tpu.memory_space<vmem>>, vector<1x8x8xf32>,
    return
  }
  func.func @transform_0(%arg0: i32, %arg1: i32) -> (i32, i32, i32) {
    %c0_i32 = arith.constant 0 : i32
    %c0_i32_0 = arith.constant 0 : i32
    %c0_i32_1 = arith.constant 0 : i32
    return %arg0, %c0_i32, %c0_i32_0 : i32, i32, i32
  }
  func.func @transform_1(%arg0: i32, %arg1: i32) -> (i32, i32) {
    %c0_i32 = arith.constant 0 : i32
    %c0_i32_0 = arith.constant 0 : i32
    %c0_i32_1 = arith.constant 0 : i32
    return %c0_i32, %c0_i32_0 : i32, i32
  }
  func.func @transform_2(%arg0: i32, %arg1: i32) -> (i32, i32) {
    %c0_i32 = arith.constant 0 : i32
    %c0_i32_0 = arith.constant 0 : i32
    %c0_i32_1 = arith.constant 0 : i32
    return %c0_i32, %c0_i32_0 : i32, i32
  }
  func.func @transform_3(%arg0: i32, %arg1: i32) -> (i32, i32) {
    %c0_i32 = arith.constant 0 : i32
    %c0_i32_0 = arith.constant 0 : i32
    %c0_i32_1 = arith.constant 0 : i32
    return %c0_i32, %c0_i32_0 : i32, i32
  }
  func.func @transform_4(%arg0: i32, %arg1: i32) -> (i32, i32) {
    %c0_i32 = arith.constant 0 : i32
    %c0_i32_0 = arith.constant 0 : i32
    %c0_i32_1 = arith.constant 0 : i32
    return %c0_i32, %c0_i32_0 : i32, i32
  }
  func.func @transform_5(%arg0: i32, %arg1: i32) -> (i32, i32) {
    %c0_i32 = arith.constant 0 : i32
    %c0_i32_0 = arith.constant 0 : i32
    %c0_i32_1 = arith.constant 0 : i32
    return %c0_i32, %c0_i32_0 : i32, i32
  }
  func.func @transform_6(%arg0: i32, %arg1: i32) -> (i32, i32) {
    %c0_i32 = arith.constant 0 : i32
    %c0_i32_0 = arith.constant 0 : i32
    %c0_i32_1 = arith.constant 0 : i32
    return %c0_i32, %c0_i32_0 : i32, i32
  }
  func.func @transform_7(%arg0: i32, %arg1: i32) -> (i32, i32) {
    %c0_i32 = arith.constant 0 : i32
    %c0_i32_0 = arith.constant 0 : i32
    %c0_i32_1 = arith.constant 0 : i32
    return %c0_i32, %c0_i32_0 : i32, i32
  }
  func.func @transform_8(%arg0: i32, %arg1: i32) -> (i32, i32) {
    %c0_i32 = arith.constant 0 : i32
    %c0_i32_0 = arith.constant 0 : i32
    %c0_i32_1 = arith.constant 0 : i32
    return %c0_i32, %c0_i32_0 : i32, i32
  }
  func.func @transform_9(%arg0: i32, %arg1: i32) -> (i32, i32) {
    %c0_i32 = arith.constant 0 : i32
    %c0_i32_0 = arith.constant 0 : i32
    %c0_i32_1 = arith.constant 0 : i32
    return %c0_i32, %c0_i32_0 : i32, i32
  }
  func.func @transform_10(%arg0: i32, %arg1: i32) -> (i32, i32) {
    %c0_i32 = arith.constant 0 : i32
    %c0_i32_0 = arith.constant 0 : i32
    %c0_i32_1 = arith.constant 0 : i32
    return %c0_i32, %c0_i32_0 : i32, i32
  }
  func.func @transform_11(%arg0: i32, %arg1: i32) -> (i32, i32) {
    %c0_i32 = arith.constant 0 : i32
    %c0_i32_0 = arith.constant 0 : i32
    %c0_i32_1 = arith.constant 0 : i32
    return %c0_i32, %c0_i32_0 : i32, i32
  }
  func.func @transform_12(%arg0: i32, %arg1: i32) -> (i32, i32) {
    %c0_i32 = arith.constant 0 : i32
    %c0_i32_0 = arith.constant 0 : i32
    %c0_i32_1 = arith.constant 0 : i32
    return %c0_i32, %c0_i32_0 : i32, i32
  }
  func.func @transform_13(%arg0: i32, %arg1: i32) -> (i32, i32, i32) {
    %c0_i32 = arith.constant 0 : i32
    %c0_i32_0 = arith.constant 0 : i32
    return %arg0, %arg1, %c0_i32 : i32, i32, i32
  }
  func.func @transform_14(%arg0: i32, %arg1: i32) -> (i32, i32, i32) {
    %c0_i32 = arith.constant 0 : i32
    %c0_i32_0 = arith.constant 0 : i32
    return %arg0, %arg1, %c0_i32 : i32, i32, i32
  }
}

</mosaic_0001>

<llo_original>
// kernel: tpu_custom_call.1
$region0: #{tpu_custom_call.1}
  #allocation0 [shape = 'u32[]', space=smem, size = 0x4, offset = 0x4, fixed_abs, tag = 'smem constant byte address 0x4 - core index']
  #allocation1 [shape = 'u32[144,128]{1,0:T(1,128)}', space=vmem, size = 0x12000, scoped, tag = 'internal scratch']
  #allocation2 [shape = 'bf16[8,96]{1,0:T(8,128)(2,1)}', space=vmem, size = 0x800, scoped, tag = 'scratch operand']
  #allocation3 [shape = 'f32[8,32]{1,0:T(8,128)}', space=vmem, size = 0x1000, scoped, tag = 'scratch operand']
  %s0 = inlined_call_operand.hbm [shape: f32[2,8,32], index: 0, kind: input, shape index: {}]
  %s1 = inlined_call_operand.hbm [shape: bf16[32,96], index: 1, kind: input, shape index: {}]
  %s2 = inlined_call_operand.vmem [shape: f32[1,96], index: 2, kind: input, shape index: {}]
  %s3 = inlined_call_operand.hbm [shape: bf16[32,32], index: 3, kind: input, shape index: {}]
  %s4 = inlined_call_operand.vmem [shape: f32[1,32], index: 4, kind: input, shape index: {}]
  %s5 = inlined_call_operand.vmem [shape: bf16[32,32], index: 5, kind: input, shape index: {}]
  %s6 = inlined_call_operand.vmem [shape: f32[1,32], index: 6, kind: input, shape index: {}]
  %s7 = inlined_call_operand.hbm [shape: bf16[32,32], index: 7, kind: input, shape index: {}]
  %s8 = inlined_call_operand.vmem [shape: f32[1,32], index: 8, kind: input, shape index: {}]
  %s9 = inlined_call_operand.vmem [shape: f32[1,32], index: 9, kind: input, shape index: {}]
  %s10 = inlined_call_operand.vmem [shape: f32[1,32], index: 10, kind: input, shape index: {}]
  %s11 = inlined_call_operand.vmem [shape: f32[1,32], index: 11, kind: input, shape index: {}]
  %s12 = inlined_call_operand.vmem [shape: f32[1,32], index: 12, kind: input, shape index: {}]
  %s13 = inlined_call_operand.hbm [shape: f32[2,8,32], index: 13, kind: output, shape index: {0}]
  %s14 = inlined_call_operand.hbm [shape: f32[2,8,8], index: 14, kind: output, shape index: {1}]
  %15 = xla_tuple %s13, %s14
  %s16 = sld [smem:[#allocation0]]
  $region113: #{tpu_custom_call.1} parent=0
    _
  %s18 = ssub.s32 1, %s16
  %s19 = scalar_select 0, %s18, %s16
  $region1: #{tpu_custom_call.1} parent=0
    #allocation4 [shape = 'u8[8192]{0}', space=vmem, size = 0x2000, scoped, tag = 'input window, operand 0']
    #allocation5 [shape = 's32[2]{0}', space=sflag, size = 0x8, scoped, tag = 'scoped memory for tpu_custom_call.1']
    #allocation6 [shape = 's32[2]{0}', space=sflag, size = 0x8, scoped, tag = 'scoped memory for tpu_custom_call.1']
    #allocation7 [shape = 'u8[8192]{0}', space=vmem, size = 0x2000, scoped, tag = 'input window, operand 1, single buffered']
    #allocation8 [shape = 's32[1]{0}', space=sflag, size = 0x4, scoped, tag = 'scoped memory for tpu_custom_call.1']
    #allocation9 [shape = 'u8[8192]{0}', space=vmem, size = 0x2000, scoped, tag = 'input window, operand 3, single buffered']
    #allocation10 [shape = 'u8[8192]{0}', space=vmem, size = 0x2000, scoped, tag = 'input window, operand 7, single buffered']
    #allocation11 [shape = 's32[1]{0}', space=sflag, size = 0x4, scoped, tag = 'scoped memory for tpu_custom_call.1']
    #allocation12 [shape = 'u8[8192]{0}', space=vmem, size = 0x2000, scoped, tag = 'output window, operand 0']
    #allocation13 [shape = 'u8[8192]{0}', space=vmem, size = 0x2000, scoped, tag = 'output window, operand 1']
    #allocation14 [shape = 's32[2]{0}', space=sflag, size = 0x8, scoped, tag = 'scoped memory for tpu_custom_call.1']
    %20 = vsyncpa [#allocation5], 0
    %s21 = scalar_lea.sflag [#allocation5], 1
    %22 = vsyncpa %s21, 0
    %23 = vsyncpa [#allocation8], 0
    %24 = vsyncpa [#allocation11], 0
    %25 = vsyncpa [#allocation6], 0
    %s26 = scalar_lea.sflag [#allocation6], 1
    %27 = vsyncpa %s26, 0
    %28 = vsyncpa [#allocation14], 0
    %s29 = scalar_lea.sflag [#allocation14], 1
    %30 = vsyncpa %s29, 0
    loop: start=0, step=1, limit=4
    $region2: #{tpu_custom_call.1} parent=1 // loop_pre_header
      _
    $region3: #{tpu_custom_call.1} parent=1 // loop_header
      %s32 = sphi 0, %s36
      %p33 = scmp.ge.s32.totalorder %s32, 4
      %s39 = sphi 0, %s51
      %s40 = sphi 0, %s47
      %s41 = sphi 0, %s39
      %s42 = sphi 0, %s40
      %s43 = sphi 0, %s41
      %s44 = sphi 0, %s42
      %s54 = sphi 0, %s56
      %s57 = sphi 0, %s54
      %s58 = sphi 0, %s57
      %s74 = sphi 0, %s58
      %s78 = sphi 0, %s78
      %s80 = sphi 0, %s78
      %s81 = sphi 0, %s80
      %s95 = sphi 0, %s81
      %s99 = sphi 0, %s99
      %s101 = sphi 0, %s99
      %s102 = sphi 0, %s101
      %s116 = sphi 0, %s102
      %s120 = sphi 0, %s120
      %s122 = sphi 0, %s120
      %s123 = sphi 0, %s122
      %s137 = sphi 0, %s123
      %s141 = sphi 0, %s141
      %s143 = sphi 0, %s141
      %s144 = sphi 0, %s143
      %s158 = sphi 0, %s144
      %s162 = sphi 0, %s162
      %s164 = sphi 0, %s162
      %s165 = sphi 0, %s164
      %s179 = sphi 0, %s165
      %s183 = sphi 0, %s183
      %s185 = sphi 0, %s183
      %s186 = sphi 0, %s185
      %s200 = sphi 0, %s186
      %s204 = sphi 0, %s204
      %s206 = sphi 0, %s204
      %s207 = sphi 0, %s206
      %s221 = sphi 0, %s207
      %s225 = sphi 0, %s225
      %s227 = sphi 0, %s225
      %s228 = sphi 0, %s227
      %s242 = sphi 0, %s228
      %s246 = sphi 0, %s246
      %s248 = sphi 0, %s246
      %s249 = sphi 0, %s248
      %s263 = sphi 0, %s249
      %s267 = sphi 0, %s267
      %s269 = sphi 0, %s267
      %s270 = sphi 0, %s269
      %s284 = sphi 0, %s270
      %s288 = sphi 0, %s288
      %s290 = sphi 0, %s288
      %s291 = sphi 0, %s290
      %s305 = sphi 0, %s291
      %s309 = sphi 0, %s309
      %s311 = sphi 0, %s309
      %s312 = sphi 0, %s311
      %s326 = sphi 0, %s312
      %s334 = sphi 0, %s336
      %s337 = sphi 0, %s334
      %s338 = sphi 0, %s337
      %s354 = sphi 0, %s338
      %s362 = sphi 0, %s364
      %s365 = sphi 0, %s362
      %s366 = sphi 0, %s365
      %s382 = sphi 0, %s366
    $region4: #{tpu_custom_call.1} parent=1 // loop_header_branch
      %35 = sbr.rel (%p33) target = $region8
    $region5: #{tpu_custom_call.1} parent=1 // loop_body
      %s37 = ssub.s32 %s32, 1
      %s38 = ssub.s32 %s32, 2
      %s45 = sadd.s32 1, %s40
      %p46 = scmp.ge.s32.totalorder %s45, 1
      %s47 = scalar_select %p46, 0, %s45
      %s48 = sadd.s32 1, %s39
      %s49 = scalar_select %p46, %s48, %s39
      %p50 = scmp.ge.s32.totalorder %s49, 2
      %s51 = scalar_select %p50, 0, %s49
      %s52 = ssub.s32 %s39, %s51
      %p53 = scmp.eq.s32.totalorder %s52, 0
      %s55 = sadd.s32 %s54, 1
      %s56 = scalar_select %p53, %s54, %s55
      %p59 = pneg %p53
      %p60 = scmp.eq.s32.totalorder %s32, 1
      %p61 = por %p59, %p60
      %p62 = scmp.ne.s32.totalorder %s54, %s57
      %p63 = scmp.eq.s32.totalorder %s32, 0
      %p64 = por %p62, %p63
      %p65 = scmp.ne.s32.totalorder %s54, %s57
      %p66 = scmp.eq.s32.totalorder %s37, 1
      %p67 = por %p65, %p66
      %p68 = scmp.ne.s32.totalorder %s57, %s58
      %p69 = scmp.eq.s32.totalorder %s37, 0
      %p70 = por %p68, %p69
      %p71 = scmp.ne.s32.totalorder %s57, %s58
      %p72 = scmp.eq.s32.totalorder %s38, 1
      %p73 = por %p71, %p72
      %p75 = scmp.ne.s32.totalorder %s58, %s74
      %p76 = scmp.eq.s32.totalorder %s38, 0
      %p77 = por %p75, %p76
      %s79 = sadd.s32 %s78, 1
      %p82 = scmp.eq.s32.totalorder %s32, 1
      %p83 = scmp.ne.s32.totalorder %s78, %s80
      %p84 = scmp.eq.s32.totalorder %s32, 0
      %p85 = por %p83, %p84
      %p86 = scmp.ne.s32.totalorder %s78, %s80
      %p87 = scmp.eq.s32.totalorder %s37, 1
      %p88 = por %p86, %p87
      %p89 = scmp.ne.s32.totalorder %s80, %s81
      %p90 = scmp.eq.s32.totalorder %s37, 0
      %p91 = por %p89, %p90
      %p92 = scmp.ne.s32.totalorder %s80, %s81
      %p93 = scmp.eq.s32.totalorder %s38, 1
      %p94 = por %p92, %p93
      %p96 = scmp.ne.s32.totalorder %s81, %s95
      %p97 = scmp.eq.s32.totalorder %s38, 0
      %p98 = por %p96, %p97
      %s100 = sadd.s32 %s99, 1
      %p103 = scmp.eq.s32.totalorder %s32, 1
      %p104 = scmp.ne.s32.totalorder %s99, %s101
      %p105 = scmp.eq.s32.totalorder %s32, 0
      %p106 = por %p104, %p105
      %p107 = scmp.ne.s32.totalorder %s99, %s101
      %p108 = scmp.eq.s32.totalorder %s37, 1
      %p109 = por %p107, %p108
      %p110 = scmp.ne.s32.totalorder %s101, %s102
      %p111 = scmp.eq.s32.totalorder %s37, 0
      %p112 = por %p110, %p111
      %p113 = scmp.ne.s32.totalorder %s101, %s102
      %p114 = scmp.eq.s32.totalorder %s38, 1
      %p115 = por %p113, %p114
      %p117 = scmp.ne.s32.totalorder %s102, %s116
      %p118 = scmp.eq.s32.totalorder %s38, 0
      %p119 = por %p117, %p118
      %s121 = sadd.s32 %s120, 1
      %p124 = scmp.eq.s32.totalorder %s32, 1
      %p125 = scmp.ne.s32.totalorder %s120, %s122
      %p126 = scmp.eq.s32.totalorder %s32, 0
      %p127 = por %p125, %p126
      %p128 = scmp.ne.s32.totalorder %s120, %s122
      %p129 = scmp.eq.s32.totalorder %s37, 1
      %p130 = por %p128, %p129
      %p131 = scmp.ne.s32.totalorder %s122, %s123
      %p132 = scmp.eq.s32.totalorder %s37, 0
      %p133 = por %p131, %p132
      %p134 = scmp.ne.s32.totalorder %s122, %s123
      %p135 = scmp.eq.s32.totalorder %s38, 1
      %p136 = por %p134, %p135
      %p138 = scmp.ne.s32.totalorder %s123, %s137
      %p139 = scmp.eq.s32.totalorder %s38, 0
      %p140 = por %p138, %p139
      %s142 = sadd.s32 %s141, 1
      %p145 = scmp.eq.s32.totalorder %s32, 1
      %p146 = scmp.ne.s32.totalorder %s141, %s143
      %p147 = scmp.eq.s32.totalorder %s32, 0
      %p148 = por %p146, %p147
      %p149 = scmp.ne.s32.totalorder %s141, %s143
      %p150 = scmp.eq.s32.totalorder %s37, 1
      %p151 = por %p149, %p150
      %p152 = scmp.ne.s32.totalorder %s143, %s144
      %p153 = scmp.eq.s32.totalorder %s37, 0
      %p154 = por %p152, %p153
      %p155 = scmp.ne.s32.totalorder %s143, %s144
      %p156 = scmp.eq.s32.totalorder %s38, 1
      %p157 = por %p155, %p156
      %p159 = scmp.ne.s32.totalorder %s144, %s158
      %p160 = scmp.eq.s32.totalorder %s38, 0
      %p161 = por %p159, %p160
      %s163 = sadd.s32 %s162, 1
      %p166 = scmp.eq.s32.totalorder %s32, 1
      %p167 = scmp.ne.s32.totalorder %s162, %s164
      %p168 = scmp.eq.s32.totalorder %s32, 0
      %p169 = por %p167, %p168
      %p170 = scmp.ne.s32.totalorder %s162, %s164
      %p171 = scmp.eq.s32.totalorder %s37, 1
      %p172 = por %p170, %p171
      %p173 = scmp.ne.s32.totalorder %s164, %s165
      %p174 = scmp.eq.s32.totalorder %s37, 0
      %p175 = por %p173, %p174
      %p176 = scmp.ne.s32.totalorder %s164, %s165
      %p177 = scmp.eq.s32.totalorder %s38, 1
      %p178 = por %p176, %p177
      %p180 = scmp.ne.s32.totalorder %s165, %s179
      %p181 = scmp.eq.s32.totalorder %s38, 0
      %p182 = por %p180, %p181
      %s184 = sadd.s32 %s183, 1
      %p187 = scmp.eq.s32.totalorder %s32, 1
      %p188 = scmp.ne.s32.totalorder %s183, %s185
      %p189 = scmp.eq.s32.totalorder %s32, 0
      %p190 = por %p188, %p189
      %p191 = scmp.ne.s32.totalorder %s183, %s185
      %p192 = scmp.eq.s32.totalorder %s37, 1
      %p193 = por %p191, %p192
      %p194 = scmp.ne.s32.totalorder %s185, %s186
      %p195 = scmp.eq.s32.totalorder %s37, 0
      %p196 = por %p194, %p195
      %p197 = scmp.ne.s32.totalorder %s185, %s186
      %p198 = scmp.eq.s32.totalorder %s38, 1
      %p199 = por %p197, %p198
      %p201 = scmp.ne.s32.totalorder %s186, %s200
      %p202 = scmp.eq.s32.totalorder %s38, 0
      %p203 = por %p201, %p202
      %s205 = sadd.s32 %s204, 1
      %p208 = scmp.eq.s32.totalorder %s32, 1
      %p209 = scmp.ne.s32.totalorder %s204, %s206
      %p210 = scmp.eq.s32.totalorder %s32, 0
      %p211 = por %p209, %p210
      %p212 = scmp.ne.s32.totalorder %s204, %s206
      %p213 = scmp.eq.s32.totalorder %s37, 1
      %p214 = por %p212, %p213
      %p215 = scmp.ne.s32.totalorder %s206, %s207
      %p216 = scmp.eq.s32.totalorder %s37, 0
      %p217 = por %p215, %p216
      %p218 = scmp.ne.s32.totalorder %s206, %s207
      %p219 = scmp.eq.s32.totalorder %s38, 1
      %p220 = por %p218, %p219
      %p222 = scmp.ne.s32.totalorder %s207, %s221
      %p223 = scmp.eq.s32.totalorder %s38, 0
      %p224 = por %p222, %p223
      %s226 = sadd.s32 %s225, 1
      %p229 = scmp.eq.s32.totalorder %s32, 1
      %p230 = scmp.ne.s32.totalorder %s225, %s227
      %p231 = scmp.eq.s32.totalorder %s32, 0
      %p232 = por %p230, %p231
      %p233 = scmp.ne.s32.totalorder %s225, %s227
      %p234 = scmp.eq.s32.totalorder %s37, 1
      %p235 = por %p233, %p234
      %p236 = scmp.ne.s32.totalorder %s227, %s228
      %p237 = scmp.eq.s32.totalorder %s37, 0
      %p238 = por %p236, %p237
      %p239 = scmp.ne.s32.totalorder %s227, %s228
      %p240 = scmp.eq.s32.totalorder %s38, 1
      %p241 = por %p239, %p240
      %p243 = scmp.ne.s32.totalorder %s228, %s242
      %p244 = scmp.eq.s32.totalorder %s38, 0
      %p245 = por %p243, %p244
      %s247 = sadd.s32 %s246, 1
      %p250 = scmp.eq.s32.totalorder %s32, 1
      %p251 = scmp.ne.s32.totalorder %s246, %s248
      %p252 = scmp.eq.s32.totalorder %s32, 0
      %p253 = por %p251, %p252
      %p254 = scmp.ne.s32.totalorder %s246, %s248
      %p255 = scmp.eq.s32.totalorder %s37, 1
      %p256 = por %p254, %p255
      %p257 = scmp.ne.s32.totalorder %s248, %s249
      %p258 = scmp.eq.s32.totalorder %s37, 0
      %p259 = por %p257, %p258
      %p260 = scmp.ne.s32.totalorder %s248, %s249
      %p261 = scmp.eq.s32.totalorder %s38, 1
      %p262 = por %p260, %p261
      %p264 = scmp.ne.s32.totalorder %s249, %s263
      %p265 = scmp.eq.s32.totalorder %s38, 0
      %p266 = por %p264, %p265
      %s268 = sadd.s32 %s267, 1
      %p271 = scmp.eq.s32.totalorder %s32, 1
      %p272 = scmp.ne.s32.totalorder %s267, %s269
      %p273 = scmp.eq.s32.totalorder %s32, 0
      %p274 = por %p272, %p273
      %p275 = scmp.ne.s32.totalorder %s267, %s269
      %p276 = scmp.eq.s32.totalorder %s37, 1
      %p277 = por %p275, %p276
      %p278 = scmp.ne.s32.totalorder %s269, %s270
      %p279 = scmp.eq.s32.totalorder %s37, 0
      %p280 = por %p278, %p279
      %p281 = scmp.ne.s32.totalorder %s269, %s270
      %p282 = scmp.eq.s32.totalorder %s38, 1
      %p283 = por %p281, %p282
      %p285 = scmp.ne.s32.totalorder %s270, %s284
      %p286 = scmp.eq.s32.totalorder %s38, 0
      %p287 = por %p285, %p286
      %s289 = sadd.s32 %s288, 1
      %p292 = scmp.eq.s32.totalorder %s32, 1
      %p293 = scmp.ne.s32.totalorder %s288, %s290
      %p294 = scmp.eq.s32.totalorder %s32, 0
      %p295 = por %p293, %p294
      %p296 = scmp.ne.s32.totalorder %s288, %s290
      %p297 = scmp.eq.s32.totalorder %s37, 1
      %p298 = por %p296, %p297
      %p299 = scmp.ne.s32.totalorder %s290, %s291
      %p300 = scmp.eq.s32.totalorder %s37, 0
      %p301 = por %p299, %p300
      %p302 = scmp.ne.s32.totalorder %s290, %s291
      %p303 = scmp.eq.s32.totalorder %s38, 1
      %p304 = por %p302, %p303
      %p306 = scmp.ne.s32.totalorder %s291, %s305
      %p307 = scmp.eq.s32.totalorder %s38, 0
      %p308 = por %p306, %p307
      %s310 = sadd.s32 %s309, 1
      %p313 = scmp.eq.s32.totalorder %s32, 1
      %p314 = scmp.ne.s32.totalorder %s309, %s311
      %p315 = scmp.eq.s32.totalorder %s32, 0
      %p316 = por %p314, %p315
      %p317 = scmp.ne.s32.totalorder %s309, %s311
      %p318 = scmp.eq.s32.totalorder %s37, 1
      %p319 = por %p317, %p318
      %p320 = scmp.ne.s32.totalorder %s311, %s312
      %p321 = scmp.eq.s32.totalorder %s37, 0
      %p322 = por %p320, %p321
      %p323 = scmp.ne.s32.totalorder %s311, %s312
      %p324 = scmp.eq.s32.totalorder %s38, 1
      %p325 = por %p323, %p324
      %p327 = scmp.ne.s32.totalorder %s312, %s326
      %p328 = scmp.eq.s32.totalorder %s38, 0
      %p329 = por %p327, %p328
      %s330 = ssub.s32 %s39, %s51
      %s331 = ssub.s32 %s40, %s47
      %s332 = sor.u32 %s330, %s331
      %p333 = scmp.eq.s32.totalorder %s332, 0
      %s335 = sadd.s32 %s334, 1
      %s336 = scalar_select %p333, %s334, %s335
      %p339 = pneg %p333
      %p340 = scmp.eq.s32.totalorder %s32, 1
      %p341 = por %p339, %p340
      %p342 = scmp.ne.s32.totalorder %s334, %s337
      %p343 = scmp.eq.s32.totalorder %s32, 0
      %p344 = por %p342, %p343
      %p345 = scmp.ne.s32.totalorder %s334, %s337
      %p346 = scmp.eq.s32.totalorder %s37, 1
      %p347 = por %p345, %p346
      %p348 = scmp.ne.s32.totalorder %s337, %s338
      %p349 = scmp.eq.s32.totalorder %s37, 0
      %p350 = por %p348, %p349
      %p351 = scmp.ne.s32.totalorder %s337, %s338
      %p352 = scmp.eq.s32.totalorder %s38, 1
      %p353 = por %p351, %p352
      %p355 = scmp.ne.s32.totalorder %s338, %s354
      %p356 = scmp.eq.s32.totalorder %s38, 0
      %p357 = por %p355, %p356
      %s358 = ssub.s32 %s39, %s51
      %s359 = ssub.s32 %s40, %s47
      %s360 = sor.u32 %s358, %s359
      %p361 = scmp.eq.s32.totalorder %s360, 0
      %s363 = sadd.s32 %s362, 1
      %s364 = scalar_select %p361, %s362, %s363
      %p367 = pneg %p361
      %p368 = scmp.eq.s32.totalorder %s32, 1
      %p369 = por %p367, %p368
      %p370 = scmp.ne.s32.totalorder %s362, %s365
      %p371 = scmp.eq.s32.totalorder %s32, 0
      %p372 = por %p370, %p371
      %p373 = scmp.ne.s32.totalorder %s362, %s365
      %p374 = scmp.eq.s32.totalorder %s37, 1
      %p375 = por %p373, %p374
      %p376 = scmp.ne.s32.totalorder %s365, %s366
      %p377 = scmp.eq.s32.totalorder %s37, 0
      %p378 = por %p376, %p377
      %p379 = scmp.ne.s32.totalorder %s365, %s366
      %p380 = scmp.eq.s32.totalorder %s38, 1
      %p381 = por %p379, %p380
      %p383 = scmp.ne.s32.totalorder %s366, %s382
      %p384 = scmp.eq.s32.totalorder %s38, 0
      %p385 = por %p383, %p384
      %p386 = scmp.le.s32.totalorder 1, %s32
      %p387 = scmp.lt.s32.totalorder %s32, 3
      %p388 = pnand %p386, %p387
      %p389 = pneg %p388
      // Predicated region
      $region9: #{tpu_custom_call.1} parent=5 // pred_check
        _
      $region10: #{tpu_custom_call.1} parent=5 // pred_check_branch
        %391 = sbr.rel (%p388) target = $region12
      $region11: #{tpu_custom_call.1} parent=5 // pred_region
        %s392 = ssub.s32 %s32, 1
        // Predicated region
        $region13: #{tpu_custom_call.1} parent=11 // pred_check
          %p393 = pneg %p91
        $region14: #{tpu_custom_call.1} parent=11 // pred_check_branch
          %395 = sbr.rel (%p393) target = $region16
        $region15: #{tpu_custom_call.1} parent=11 // pred_region
          %s397 = ssub.s32 256, 256
          %398 = vsyncadd [#allocation8], %s397
          %s399 = sshll.u32 [#allocation7], 4
          %s400 = int_to_ptr.vmem [resolvable:$true] %s399
          %405 = dma.hbm_to_vmem [thread:$0]  %s1, 256, %s400, [#allocation8], 64, 64, 4
        $region16: #{tpu_custom_call.1} parent=11 // pred_fallthru
          _
        // Predicated region
        $region17: #{tpu_custom_call.1} parent=11 // pred_check
          %p406 = pneg %p112
        $region18: #{tpu_custom_call.1} parent=11 // pred_check_branch
          %408 = sbr.rel (%p406) target = $region20
        $region19: #{tpu_custom_call.1} parent=11 // pred_region
          _
        $region20: #{tpu_custom_call.1} parent=11 // pred_fallthru
          _
        // Predicated region
        $region21: #{tpu_custom_call.1} parent=11 // pred_check
          %p409 = pneg %p133
        $region22: #{tpu_custom_call.1} parent=11 // pred_check_branch
          %411 = sbr.rel (%p409) target = $region24
        $region23: #{tpu_custom_call.1} parent=11 // pred_region
          %s413 = ssub.s32 256, 256
          %414 = vsyncadd [#allocation8], %s413
          %s415 = sshll.u32 [#allocation9], 4
          %s416 = int_to_ptr.vmem [resolvable:$true] %s415
          %421 = dma.hbm_to_vmem [thread:$0]  %s3, 256, %s416, [#allocation8], 64, 64, 4
        $region24: #{tpu_custom_call.1} parent=11 // pred_fallthru
          _
        // Predicated region
        $region25: #{tpu_custom_call.1} parent=11 // pred_check
          %p422 = pneg %p154
        $region26: #{tpu_custom_call.1} parent=11 // pred_check_branch
          %424 = sbr.rel (%p422) target = $region28
        $region27: #{tpu_custom_call.1} parent=11 // pred_region
          _
        $region28: #{tpu_custom_call.1} parent=11 // pred_fallthru
          _
        // Predicated region
        $region29: #{tpu_custom_call.1} parent=11 // pred_check
          %p425 = pneg %p175
        $region30: #{tpu_custom_call.1} parent=11 // pred_check_branch
          %427 = sbr.rel (%p425) target = $region32
        $region31: #{tpu_custom_call.1} parent=11 // pred_region
          _
        $region32: #{tpu_custom_call.1} parent=11 // pred_fallthru
          _
        // Predicated region
        $region33: #{tpu_custom_call.1} parent=11 // pred_check
          %p428 = pneg %p196
        $region34: #{tpu_custom_call.1} parent=11 // pred_check_branch
          %430 = sbr.rel (%p428) target = $region36
        $region35: #{tpu_custom_call.1} parent=11 // pred_region
          _
        $region36: #{tpu_custom_call.1} parent=11 // pred_fallthru
          _
        // Predicated region
        $region37: #{tpu_custom_call.1} parent=11 // pred_check
          %p431 = pneg %p217
        $region38: #{tpu_custom_call.1} parent=11 // pred_check_branch
          %433 = sbr.rel (%p431) target = $region40
        $region39: #{tpu_custom_call.1} parent=11 // pred_region
          %s435 = ssub.s32 256, 256
          %436 = vsyncadd [#allocation11], %s435
          %s437 = sshll.u32 [#allocation10], 4
          %s438 = int_to_ptr.vmem [resolvable:$true] %s437
          %443 = dma.hbm_to_vmem [thread:$0]  %s7, 256, %s438, [#allocation11], 64, 64, 4
        $region40: #{tpu_custom_call.1} parent=11 // pred_fallthru
          _
        // Predicated region
        $region41: #{tpu_custom_call.1} parent=11 // pred_check
          %p444 = pneg %p238
        $region42: #{tpu_custom_call.1} parent=11 // pred_check_branch
          %446 = sbr.rel (%p444) target = $region44
        $region43: #{tpu_custom_call.1} parent=11 // pred_region
          _
        $region44: #{tpu_custom_call.1} parent=11 // pred_fallthru
          _
        // Predicated region
        $region45: #{tpu_custom_call.1} parent=11 // pred_check
          %p447 = pneg %p259
        $region46: #{tpu_custom_call.1} parent=11 // pred_check_branch
          %449 = sbr.rel (%p447) target = $region48
        $region47: #{tpu_custom_call.1} parent=11 // pred_region
          _
        $region48: #{tpu_custom_call.1} parent=11 // pred_fallthru
          _
        // Predicated region
        $region49: #{tpu_custom_call.1} parent=11 // pred_check
          %p450 = pneg %p280
        $region50: #{tpu_custom_call.1} parent=11 // pred_check_branch
          %452 = sbr.rel (%p450) target = $region52
        $region51: #{tpu_custom_call.1} parent=11 // pred_region
          _
        $region52: #{tpu_custom_call.1} parent=11 // pred_fallthru
          _
        // Predicated region
        $region53: #{tpu_custom_call.1} parent=11 // pred_check
          %p453 = pneg %p301
        $region54: #{tpu_custom_call.1} parent=11 // pred_check_branch
          %455 = sbr.rel (%p453) target = $region56
        $region55: #{tpu_custom_call.1} parent=11 // pred_region
          _
        $region56: #{tpu_custom_call.1} parent=11 // pred_fallthru
          _
        // Predicated region
        $region57: #{tpu_custom_call.1} parent=11 // pred_check
          %p456 = pneg %p322
        $region58: #{tpu_custom_call.1} parent=11 // pred_check_branch
          %458 = sbr.rel (%p456) target = $region60
        $region59: #{tpu_custom_call.1} parent=11 // pred_region
          _
        $region60: #{tpu_custom_call.1} parent=11 // pred_fallthru
          _
      $region12: #{tpu_custom_call.1} parent=5 // pred_fallthru
        _
      %p459 = scmp.lt.s32.totalorder %s32, 2
      // Predicated region
      $region61: #{tpu_custom_call.1} parent=5 // pred_check
        %p460 = pneg %p459
      $region62: #{tpu_custom_call.1} parent=5 // pred_check_branch
        %462 = sbr.rel (%p460) target = $region64
      $region63: #{tpu_custom_call.1} parent=5 // pred_region
        // Predicated region
        $region65: #{tpu_custom_call.1} parent=63 // pred_check
          %p463 = pneg %p64
        $region66: #{tpu_custom_call.1} parent=63 // pred_check_branch
          %465 = sbr.rel (%p463) target = $region68
        $region67: #{tpu_custom_call.1} parent=63 // pred_region
          %s466 = sand.u32 %s54, 1
          %s467 = scalar_lea.sflag [#allocation5], %s466
          %s468 = sand.u32 %s54, 1
          %s469 = smul.addr %s468, 8
          %s470 = scalar_lea.vmem [#allocation4], %s469
          %s472 = ssub.s32 128, 128
          %473 = vsyncadd %s467, %s472
          %s474 = smul.addr %s39, 128
          %s475 = scalar_lea.hbm %s0, %s474
          %s477 = sshll.u32 %s470, 4
          %s478 = int_to_ptr.vmem [resolvable:$true] %s477
          %480 = dma.hbm_to_vmem [thread:$0]  %s475, 128, %s478, %s467
        $region68: #{tpu_custom_call.1} parent=63 // pred_fallthru
          _
      $region64: #{tpu_custom_call.1} parent=5 // pred_fallthru
        _
      %p481 = scmp.le.s32.totalorder 1, %s32
      %p482 = scmp.lt.s32.totalorder %s32, 3
      %p483 = pnand %p481, %p482
      %p484 = pneg %p483
      // Predicated region
      $region69: #{tpu_custom_call.1} parent=5 // pred_check
        _
      $region70: #{tpu_custom_call.1} parent=5 // pred_check_branch
        %486 = sbr.rel (%p483) target = $region72
      $region71: #{tpu_custom_call.1} parent=5 // pred_region
        %s487 = ssub.s32 %s32, 1
        %s488 = sand.u32 %s57, 1
        %s489 = scalar_lea.sflag [#allocation5], %s488
        %s490 = sand.u32 %s57, 1
        %s491 = smul.addr %s490, 8
        %s492 = scalar_lea.vmem [#allocation4], %s491
        // Predicated region
        $region73: #{tpu_custom_call.1} parent=71 // pred_check
          %p493 = pneg %p70
        $region74: #{tpu_custom_call.1} parent=71 // pred_check_branch
          %495 = sbr.rel (%p493) target = $region76
        $region75: #{tpu_custom_call.1} parent=71 // pred_region
          %496 = dma.done %s489, 128
        $region76: #{tpu_custom_call.1} parent=71 // pred_fallthru
          _
        // Predicated region
        $region77: #{tpu_custom_call.1} parent=71 // pred_check
          %p497 = pneg %p91
        $region78: #{tpu_custom_call.1} parent=71 // pred_check_branch
          %499 = sbr.rel (%p497) target = $region80
        $region79: #{tpu_custom_call.1} parent=71 // pred_region
          %500 = dma.done [#allocation8], 256
        $region80: #{tpu_custom_call.1} parent=71 // pred_fallthru
          _
        // Predicated region
        $region81: #{tpu_custom_call.1} parent=71 // pred_check
          %p501 = pneg %p133
        $region82: #{tpu_custom_call.1} parent=71 // pred_check_branch
          %503 = sbr.rel (%p501) target = $region84
        $region83: #{tpu_custom_call.1} parent=71 // pred_region
          %504 = dma.done [#allocation8], 256
        $region84: #{tpu_custom_call.1} parent=71 // pred_fallthru
          _
        // Predicated region
        $region85: #{tpu_custom_call.1} parent=71 // pred_check
          %p505 = pneg %p217
        $region86: #{tpu_custom_call.1} parent=71 // pred_check_branch
          %507 = sbr.rel (%p505) target = $region88
        $region87: #{tpu_custom_call.1} parent=71 // pred_region
          %508 = dma.done [#allocation11], 256
        $region88: #{tpu_custom_call.1} parent=71 // pred_fallthru
          _
        %s509 = sand.u32 %s57, 1
        %s510 = scalar_lea.sflag [#allocation5], %s509
        %s511 = sand.u32 %s57, 1
        %s512 = smul.addr %s511, 8
        %s513 = scalar_lea.vmem [#allocation4], %s512
        %p514 = pneg %p70
        %p515 = pneg %p67
        %p516 = pneg %p91
        %p517 = pneg %p88
        %p518 = pneg %p112
        %p519 = pneg %p109
        %p520 = pneg %p133
        %p521 = pneg %p130
        %p522 = pneg %p154
        %p523 = pneg %p151
        %p524 = pneg %p175
        %p525 = pneg %p172
        %p526 = pneg %p196
        %p527 = pneg %p193
        %p528 = pneg %p217
        %p529 = pneg %p214
        %p530 = pneg %p238
        %p531 = pneg %p235
        %p532 = pneg %p259
        %p533 = pneg %p256
        %p534 = pneg %p280
        %p535 = pneg %p277
        %p536 = pneg %p301
        %p537 = pneg %p298
        %p538 = pneg %p322
        %p539 = pneg %p319
        %p540 = pneg %p350
        %p541 = pneg %p347
        %s542 = sand.u32 %s337, 1
        %s543 = scalar_lea.sflag [#allocation6], %s542
        %s544 = sand.u32 %s337, 1
        %s545 = smul.addr %s544, 8
        %s546 = scalar_lea.vmem [#allocation12], %s545
        %p547 = pneg %p378
        %p548 = pneg %p375
        %s549 = sand.u32 %s365, 1
        %s550 = scalar_lea.sflag [#allocation14], %s549
        %s551 = sand.u32 %s365, 1
        %s552 = smul.addr %s551, 8
        %s553 = scalar_lea.vmem [#allocation13], %s552
        %p555 = scmp.eq.s32.totalorder %s42, 0
        // Predicated region
        $region89: #{tpu_custom_call.1} parent=71 // pred_check
          %p556 = pneg %p555
        $region90: #{tpu_custom_call.1} parent=71 // pred_check_branch
          %558 = sbr.rel (%p556) target = $region92
        $region91: #{tpu_custom_call.1} parent=71 // pred_region
          %v559 = vld [vmem:[%s492] sm:$0xff]
          %v560 = vpack.c.bf16 %v559, %v559
          %v561 = vld [vmem:[#allocation7] sm:$0xf]
          %v562 = vld [vmem:[#allocation7 + $0x4] sm:$0xf]
          %v563 = vld [vmem:[#allocation7 + $0x8] sm:$0xf]
          %v564 = vld [vmem:[#allocation7 + $0xc] sm:$0xf]
          %v565 = vld [vmem:[%s2] sm:$0x1]
          %v567 = vlaneseq
          %v568 = vshrl.u32 %v567, 7
          %v569 = vsub.s32 0, %v568
          %v570 = vrot.slane %v565, %v569
          %v576 = vunpack.c.l.b16 %v561
          %v577 = vunpack.c.l.b16 %v562
          %v578 = vunpack.c.l.b16 %v563
          %v579 = vunpack.c.l.b16 %v564
          %v580 = vpack.c.b16 %v577, %v576
          %v581 = vpack.c.b16 %v579, %v578
          %vm584 = vcmask 261120
          %v586 = vsel %vm584, %v560, 0
          %588 = vmatprep.subr.bf16.mxu0 0
          %589 = vmatpush1.bf16.msra.mxu0 %v580
          %590 = vmatprep.subr.bf16.mxu0 0
          %591 = vmatpush1.bf16.msra.mxu0 %v581
          %592 = vmatprep.subr.bf16.mxu0 0
          %593 = vmatpush1.bf16.msra.mxu0 0
          %594 = vmatprep.subr.bf16.mxu0 0
          %595 = vmatpush1.bf16.msra.mxu0 0
          %596 = vmatprep.subr.bf16.mxu0 0
          %597 = vmatpush1.bf16.msra.mxu0 0
          %598 = vmatprep.subr.bf16.mxu0 0
          %599 = vmatpush1.bf16.msra.mxu0 0
          %600 = vmatprep.subr.bf16.mxu0 0
          %601 = vmatpush1.bf16.msra.mxu0 0
          %602 = vmatprep.subr.bf16.mxu0 0
          %603 = vmatpush1.bf16.msra.mxu0 0
          %604 = vmatprep.subr.bf16.mxu0 0
          %605 = vmatpush1.bf16.msra.mxu0 0
          %606 = vmatprep.subr.bf16.mxu0 0
          %607 = vmatpush1.bf16.msra.mxu0 0
          %608 = vmatprep.subr.bf16.mxu0 0
          %609 = vmatpush1.bf16.msra.mxu0 0
          %610 = vmatprep.subr.bf16.mxu0 0
          %611 = vmatpush1.bf16.msra.mxu0 0
          %612 = vmatprep.subr.bf16.mxu0 0
          %613 = vmatpush1.bf16.msra.mxu0 0
          %614 = vmatprep.subr.bf16.mxu0 0
          %615 = vmatpush1.bf16.msra.mxu0 0
          %616 = vmatprep.subr.bf16.mxu0 0
          %617 = vmatpush1.bf16.msra.mxu0 0
          %618 = vmatprep.subr.bf16.mxu0 0
          %619 = vmatpush1.bf16.msra.mxu0 0
          %620 = vmatprep.mubr.bf16.mxu0 0
          %621 = vmatmul.mubr.bf16.gmra.mrb[0].mxu0 %v586
          %v622 = vpop.f32.mrb[0].mxu0
          %v623 = vadd.f32 %v570, %v622
          %v624 = vpop.f32.mrb[0].mxu0
          %v625 = vpop.f32.mrb[0].mxu0
          %v626 = vpop.f32.mrb[0].mxu0
          %627 = vdwg.mxu0
          %v628 = vpack.c.bf16 %v623, %v623
          %vm629 = vcmask 781312
          %630 = vst.msk [vmem:[#allocation2] sm:$0xf] %vm629, %v628
        $region92: #{tpu_custom_call.1} parent=71 // pred_fallthru
          _
        %s631 = smul.u32 %s42, 8
        %s632 = scalar_lea.vmem %s492, %s631 [#allocation4]
        %v633 = vld [vmem:[%s632] sm:$0xff]
        %s634 = sshra.s32 %s631, 3
        %s635 = sand.u32 %s631, 7
        %s636 = smul.addr %s634, 4
        %s637 = scalar_lea.vmem [#allocation2], %s636
        %v638 = vld [vmem:[%s637] sm:$0xf]
        %v639 = vld [vmem:[#allocation2] sm:$0xf]
        %v641 = vunpack.c.l.b16 %v639
        %v642 = vpack.c.b16 %v641, %v641
        %643 = vrot.lane.b32.xlu0 %v642, 96
        %v644 = vpop.permute.xlu0 %643
        %vm645 = vcmask 64512
        %v647 = vsel %vm645, %v638, 0
        %v650 = vsel %vm645, %v644, 0
        %652 = vmatprep.subr.bf16.mxu0 0
        %653 = vmatpush1.bf16.xpose.msra.mxu0 %v650
        %654 = vmatprep.subr.bf16.mxu0 0
        %655 = vmatpush1.bf16.xpose.msra.mxu0 0
        %656 = vmatprep.subr.bf16.mxu0 0
        %657 = vmatpush1.bf16.xpose.msra.mxu0 0
        %658 = vmatprep.subr.bf16.mxu0 0
        %659 = vmatpush1.bf16.xpose.msra.mxu0 0
        %660 = vmatprep.subr.bf16.mxu0 0
        %661 = vmatpush1.bf16.xpose.msra.mxu0 0
        %662 = vmatprep.subr.bf16.mxu0 0
        %663 = vmatpush1.bf16.xpose.msra.mxu0 0
        %664 = vmatprep.subr.bf16.mxu0 0
        %665 = vmatpush1.bf16.xpose.msra.mxu0 0
        %666 = vmatprep.subr.bf16.mxu0 0
        %667 = vmatpush1.bf16.xpose.msra.mxu0 0
        %668 = vmatprep.subr.bf16.mxu0 0
        %669 = vmatpush1.bf16.xpose.msra.mxu0 0
        %670 = vmatprep.subr.bf16.mxu0 0
        %671 = vmatpush1.bf16.xpose.msra.mxu0 0
        %672 = vmatprep.subr.bf16.mxu0 0
        %673 = vmatpush1.bf16.xpose.msra.mxu0 0
        %674 = vmatprep.subr.bf16.mxu0 0
        %675 = vmatpush1.bf16.xpose.msra.mxu0 0
        %676 = vmatprep.subr.bf16.mxu0 0
        %677 = vmatpush1.bf16.xpose.msra.mxu0 0
        %678 = vmatprep.subr.bf16.mxu0 0
        %679 = vmatpush1.bf16.xpose.msra.mxu0 0
        %680 = vmatprep.subr.bf16.mxu0 0
        %681 = vmatpush1.bf16.xpose.msra.mxu0 0
        %682 = vmatprep.subr.bf16.mxu0 0
        %683 = vmatpush1.bf16.xpose.msra.mxu0 0
        %684 = vmatprep.mubr.bf16.mxu0 0
        %685 = vmatmul.mubr.bf16.gmra.mrb[0].mxu0 %v647
        %v686 = vpop.f32.mrb[0].mxu0
        %v687 = vadd.f32 0.0, %v686
        %v688 = vpop.f32.mrb[0].mxu0
        %v689 = vpop.f32.mrb[0].mxu0
        %v690 = vpop.f32.mrb[0].mxu0
        %691 = vdwg.mxu0
        %v692 = vsel %vm645, %v687, -inf
        %693 = vmax.xlane.f32.xlu0 %v692
        %v694 = vpop.xlane.xlu0 %693
        %v695 = vsub.f32 %v687, %v694
        %v696 = vmul.f32 %v695, 1.442695
        %v697 = vpow.pop %v696
        %v698 = vsel %vm645, %v697, 0.0
        %699 = vadd.xlane.f32.xlu0 %v698
        %v700 = vpop.xlane.xlu0 %699
        %v701 = vrcp.pop %v700
        %v702 = vmul.f32 %v697, %v701
        %v703 = vpack.c.bf16 %v702, %v702
        %704 = vrot.lane.b32.xlu0 %v642, 64
        %v705 = vpop.permute.xlu0 %704
        %v707 = vsel %vm645, %v703, 0
        %vm709 = vcmask 1043456
        %v711 = vsel %vm709, %v705, 0
        %713 = vmatprep.subr.bf16.mxu0 0
        %714 = vmatpush1.bf16.msra.mxu0 %v711
        %715 = vmatprep.subr.bf16.mxu0 0
        %716 = vmatpush1.bf16.msra.mxu0 0
        %717 = vmatprep.subr.bf16.mxu0 0
        %718 = vmatpush1.bf16.msra.mxu0 0
        %719 = vmatprep.subr.bf16.mxu0 0
        %720 = vmatpush1.bf16.msra.mxu0 0
        %721 = vmatprep.subr.bf16.mxu0 0
        %722 = vmatpush1.bf16.msra.mxu0 0
        %723 = vmatprep.subr.bf16.mxu0 0
        %724 = vmatpush1.bf16.msra.mxu0 0
        %725 = vmatprep.subr.bf16.mxu0 0
        %726 = vmatpush1.bf16.msra.mxu0 0
        %727 = vmatprep.subr.bf16.mxu0 0
        %728 = vmatpush1.bf16.msra.mxu0 0
        %729 = vmatprep.subr.bf16.mxu0 0
        %730 = vmatpush1.bf16.msra.mxu0 0
        %731 = vmatprep.subr.bf16.mxu0 0
        %732 = vmatpush1.bf16.msra.mxu0 0
        %733 = vmatprep.subr.bf16.mxu0 0
        %734 = vmatpush1.bf16.msra.mxu0 0
        %735 = vmatprep.subr.bf16.mxu0 0
        %736 = vmatpush1.bf16.msra.mxu0 0
        %737 = vmatprep.subr.bf16.mxu0 0
        %738 = vmatpush1.bf16.msra.mxu0 0
        %739 = vmatprep.subr.bf16.mxu0 0
        %740 = vmatpush1.bf16.msra.mxu0 0
        %741 = vmatprep.subr.bf16.mxu0 0
        %742 = vmatpush1.bf16.msra.mxu0 0
        %743 = vmatprep.subr.bf16.mxu0 0
        %744 = vmatpush1.bf16.msra.mxu0 0
        %745 = vmatprep.mubr.bf16.mxu0 0
        %746 = vmatmul.mubr.bf16.gmra.mrb[0].mxu0 %v707
        %v747 = vpop.f32.mrb[0].mxu0
        %v748 = vadd.f32 0.0, %v747
        %v749 = vpop.f32.mrb[0].mxu0
        %v750 = vpop.f32.mrb[0].mxu0
        %v751 = vpop.f32.mrb[0].mxu0
        %752 = vdwg.mxu0
        %753 = vst.msk [vmem:[#allocation3] sm:$0xff] %vm645, %v748
        %v754 = vld [vmem:[#allocation2] sm:$0xf]
        %v756 = vunpack.c.l.b16 %v638
        %v757 = vpack.c.b16 %v756, %v756
        %758 = vrot.lane.b32.xlu0 %v757, 120
        %v759 = vpop.permute.xlu0 %758
        %v761 = vunpack.c.l.b16 %v754
        %v762 = vpack.c.b16 %v761, %v761
        %763 = vrot.lane.b32.xlu0 %v762, 88
        %v764 = vpop.permute.xlu0 %763
        %v766 = vsel %vm645, %v759, 0
        %v769 = vsel %vm645, %v764, 0
        %771 = vmatprep.subr.bf16.mxu0 0
        %772 = vmatpush1.bf16.xpose.msra.mxu0 %v769
        %773 = vmatprep.subr.bf16.mxu0 0
        %774 = vmatpush1.bf16.xpose.msra.mxu0 0
        %775 = vmatprep.subr.bf16.mxu0 0
        %776 = vmatpush1.bf16.xpose.msra.mxu0 0
        %777 = vmatprep.subr.bf16.mxu0 0
        %778 = vmatpush1.bf16.xpose.msra.mxu0 0
        %779 = vmatprep.subr.bf16.mxu0 0
        %780 = vmatpush1.bf16.xpose.msra.mxu0 0
        %781 = vmatprep.subr.bf16.mxu0 0
        %782 = vmatpush1.bf16.xpose.msra.mxu0 0
        %783 = vmatprep.subr.bf16.mxu0 0
        %784 = vmatpush1.bf16.xpose.msra.mxu0 0
        %785 = vmatprep.subr.bf16.mxu0 0
        %786 = vmatpush1.bf16.xpose.msra.mxu0 0
        %787 = vmatprep.subr.bf16.mxu0 0
        %788 = vmatpush1.bf16.xpose.msra.mxu0 0
        %789 = vmatprep.subr.bf16.mxu0 0
        %790 = vmatpush1.bf16.xpose.msra.mxu0 0
        %791 = vmatprep.subr.bf16.mxu0 0
        %792 = vmatpush1.bf16.xpose.msra.mxu0 0
        %793 = vmatprep.subr.bf16.mxu0 0
        %794 = vmatpush1.bf16.xpose.msra.mxu0 0
        %795 = vmatprep.subr.bf16.mxu0 0
        %796 = vmatpush1.bf16.xpose.msra.mxu0 0
        %797 = vmatprep.subr.bf16.mxu0 0
        %798 = vmatpush1.bf16.xpose.msra.mxu0 0
        %799 = vmatprep.subr.bf16.mxu0 0
        %800 = vmatpush1.bf16.xpose.msra.mxu0 0
        %801 = vmatprep.subr.bf16.mxu0 0
        %802 = vmatpush1.bf16.xpose.msra.mxu0 0
        %803 = vmatprep.mubr.bf16.mxu0 0
        %804 = vmatmul.mubr.bf16.gmra.mrb[0].mxu0 %v766
        %v805 = vpop.f32.mrb[0].mxu0
        %v806 = vadd.f32 0.0, %v805
        %v807 = vpop.f32.mrb[0].mxu0
        %v808 = vpop.f32.mrb[0].mxu0
        %v809 = vpop.f32.mrb[0].mxu0
        %810 = vdwg.mxu0
        %v811 = vsel %vm645, %v806, -inf
        %812 = vmax.xlane.f32.xlu0 %v811
        %v813 = vpop.xlane.xlu0 %812
        %v814 = vsub.f32 %v806, %v813
        %v815 = vmul.f32 %v814, 1.442695
        %v816 = vpow.pop %v815
        %v817 = vsel %vm645, %v816, 0.0
        %818 = vadd.xlane.f32.xlu0 %v817
        %v819 = vpop.xlane.xlu0 %818
        %v820 = vrcp.pop %v819
        %v821 = vmul.f32 %v816, %v820
        %v822 = vadd.f32 %v702, %v821
        %v823 = vpack.c.bf16 %v821, %v821
        %824 = vrot.lane.b32.xlu0 %v762, 56
        %v825 = vpop.permute.xlu0 %824
        %v827 = vsel %vm645, %v823, 0
        %v830 = vsel %vm709, %v825, 0
        %832 = vmatprep.subr.bf16.mxu0 0
        %833 = vmatpush1.bf16.msra.mxu0 %v830
        %834 = vmatprep.subr.bf16.mxu0 0
        %835 = vmatpush1.bf16.msra.mxu0 0
        %836 = vmatprep.subr.bf16.mxu0 0
        %837 = vmatpush1.bf16.msra.mxu0 0
        %838 = vmatprep.subr.bf16.mxu0 0
        %839 = vmatpush1.bf16.msra.mxu0 0
        %840 = vmatprep.subr.bf16.mxu0 0
        %841 = vmatpush1.bf16.msra.mxu0 0
        %842 = vmatprep.subr.bf16.mxu0 0
        %843 = vmatpush1.bf16.msra.mxu0 0
        %844 = vmatprep.subr.bf16.mxu0 0
        %845 = vmatpush1.bf16.msra.mxu0 0
        %846 = vmatprep.subr.bf16.mxu0 0
        %847 = vmatpush1.bf16.msra.mxu0 0
        %848 = vmatprep.subr.bf16.mxu0 0
        %849 = vmatpush1.bf16.msra.mxu0 0
        %850 = vmatprep.subr.bf16.mxu0 0
        %851 = vmatpush1.bf16.msra.mxu0 0
        %852 = vmatprep.subr.bf16.mxu0 0
        %853 = vmatpush1.bf16.msra.mxu0 0
        %854 = vmatprep.subr.bf16.mxu0 0
        %855 = vmatpush1.bf16.msra.mxu0 0
        %856 = vmatprep.subr.bf16.mxu0 0
        %857 = vmatpush1.bf16.msra.mxu0 0
        %858 = vmatprep.subr.bf16.mxu0 0
        %859 = vmatpush1.bf16.msra.mxu0 0
        %860 = vmatprep.subr.bf16.mxu0 0
        %861 = vmatpush1.bf16.msra.mxu0 0
        %862 = vmatprep.subr.bf16.mxu0 0
        %863 = vmatpush1.bf16.msra.mxu0 0
        %864 = vmatprep.mubr.bf16.mxu0 0
        %865 = vmatmul.mubr.bf16.gmra.mrb[0].mxu0 %v827
        %v866 = vpop.f32.mrb[0].mxu0
        %v867 = vadd.f32 0.0, %v866
        %v868 = vpop.f32.mrb[0].mxu0
        %v869 = vpop.f32.mrb[0].mxu0
        %v870 = vpop.f32.mrb[0].mxu0
        %871 = vdwg.mxu0
        %873 = vrot.lane.b32.xlu0 %v867, 8
        %v874 = vpop.permute.xlu0 %873
        %vm876 = vcmask 130112
        %877 = vst.msk [vmem:[#allocation3] sm:$0xff] %vm876, %v874
        %v878 = vld [vmem:[#allocation2] sm:$0xf]
        %879 = vrot.lane.b32.xlu0 %v757, 112
        %v880 = vpop.permute.xlu0 %879
        %v882 = vunpack.c.l.b16 %v878
        %v883 = vpack.c.b16 %v882, %v882
        %884 = vrot.lane.b32.xlu0 %v883, 80
        %v885 = vpop.permute.xlu0 %884
        %v887 = vsel %vm645, %v880, 0
        %v890 = vsel %vm645, %v885, 0
        %892 = vmatprep.subr.bf16.mxu0 0
        %893 = vmatpush1.bf16.xpose.msra.mxu0 %v890
        %894 = vmatprep.subr.bf16.mxu0 0
        %895 = vmatpush1.bf16.xpose.msra.mxu0 0
        %896 = vmatprep.subr.bf16.mxu0 0
        %897 = vmatpush1.bf16.xpose.msra.mxu0 0
        %898 = vmatprep.subr.bf16.mxu0 0
        %899 = vmatpush1.bf16.xpose.msra.mxu0 0
        %900 = vmatprep.subr.bf16.mxu0 0
        %901 = vmatpush1.bf16.xpose.msra.mxu0 0
        %902 = vmatprep.subr.bf16.mxu0 0
        %903 = vmatpush1.bf16.xpose.msra.mxu0 0
        %904 = vmatprep.subr.bf16.mxu0 0
        %905 = vmatpush1.bf16.xpose.msra.mxu0 0
        %906 = vmatprep.subr.bf16.mxu0 0
        %907 = vmatpush1.bf16.xpose.msra.mxu0 0
        %908 = vmatprep.subr.bf16.mxu0 0
        %909 = vmatpush1.bf16.xpose.msra.mxu0 0
        %910 = vmatprep.subr.bf16.mxu0 0
        %911 = vmatpush1.bf16.xpose.msra.mxu0 0
        %912 = vmatprep.subr.bf16.mxu0 0
        %913 = vmatpush1.bf16.xpose.msra.mxu0 0
        %914 = vmatprep.subr.bf16.mxu0 0
        %915 = vmatpush1.bf16.xpose.msra.mxu0 0
        %916 = vmatprep.subr.bf16.mxu0 0
        %917 = vmatpush1.bf16.xpose.msra.mxu0 0
        %918 = vmatprep.subr.bf16.mxu0 0
        %919 = vmatpush1.bf16.xpose.msra.mxu0 0
        %920 = vmatprep.subr.bf16.mxu0 0
        %921 = vmatpush1.bf16.xpose.msra.mxu0 0
        %922 = vmatprep.subr.bf16.mxu0 0
        %923 = vmatpush1.bf16.xpose.msra.mxu0 0
        %924 = vmatprep.mubr.bf16.mxu0 0
        %925 = vmatmul.mubr.bf16.gmra.mrb[0].mxu0 %v887
        %v926 = vpop.f32.mrb[0].mxu0
        %v927 = vadd.f32 0.0, %v926
        %v928 = vpop.f32.mrb[0].mxu0
        %v929 = vpop.f32.mrb[0].mxu0
        %v930 = vpop.f32.mrb[0].mxu0
        %931 = vdwg.mxu0
        %v932 = vsel %vm645, %v927, -inf
        %933 = vmax.xlane.f32.xlu0 %v932
        %v934 = vpop.xlane.xlu0 %933
        %v935 = vsub.f32 %v927, %v934
        %v936 = vmul.f32 %v935, 1.442695
        %v937 = vpow.pop %v936
        %v938 = vsel %vm645, %v937, 0.0
        %939 = vadd.xlane.f32.xlu0 %v938
        %v940 = vpop.xlane.xlu0 %939
        %v941 = vrcp.pop %v940
        %v942 = vmul.f32 %v937, %v941
        %v943 = vadd.f32 %v822, %v942
        %v944 = vpack.c.bf16 %v942, %v942
        %945 = vrot.lane.b32.xlu0 %v883, 48
        %v946 = vpop.permute.xlu0 %945
        %v948 = vsel %vm645, %v944, 0
        %v951 = vsel %vm709, %v946, 0
        %953 = vmatprep.subr.bf16.mxu0 0
        %954 = vmatpush1.bf16.msra.mxu0 %v951
        %955 = vmatprep.subr.bf16.mxu0 0
        %956 = vmatpush1.bf16.msra.mxu0 0
        %957 = vmatprep.subr.bf16.mxu0 0
        %958 = vmatpush1.bf16.msra.mxu0 0
        %959 = vmatprep.subr.bf16.mxu0 0
        %960 = vmatpush1.bf16.msra.mxu0 0
        %961 = vmatprep.subr.bf16.mxu0 0
        %962 = vmatpush1.bf16.msra.mxu0 0
        %963 = vmatprep.subr.bf16.mxu0 0
        %964 = vmatpush1.bf16.msra.mxu0 0
        %965 = vmatprep.subr.bf16.mxu0 0
        %966 = vmatpush1.bf16.msra.mxu0 0
        %967 = vmatprep.subr.bf16.mxu0 0
        %968 = vmatpush1.bf16.msra.mxu0 0
        %969 = vmatprep.subr.bf16.mxu0 0
        %970 = vmatpush1.bf16.msra.mxu0 0
        %971 = vmatprep.subr.bf16.mxu0 0
        %972 = vmatpush1.bf16.msra.mxu0 0
        %973 = vmatprep.subr.bf16.mxu0 0
        %974 = vmatpush1.bf16.msra.mxu0 0
        %975 = vmatprep.subr.bf16.mxu0 0
        %976 = vmatpush1.bf16.msra.mxu0 0
        %977 = vmatprep.subr.bf16.mxu0 0
        %978 = vmatpush1.bf16.msra.mxu0 0
        %979 = vmatprep.subr.bf16.mxu0 0
        %980 = vmatpush1.bf16.msra.mxu0 0
        %981 = vmatprep.subr.bf16.mxu0 0
        %982 = vmatpush1.bf16.msra.mxu0 0
        %983 = vmatprep.subr.bf16.mxu0 0
        %984 = vmatpush1.bf16.msra.mxu0 0
        %985 = vmatprep.mubr.bf16.mxu0 0
        %986 = vmatmul.mubr.bf16.gmra.mrb[0].mxu0 %v948
        %v987 = vpop.f32.mrb[0].mxu0
        %v988 = vadd.f32 0.0, %v987
        %v989 = vpop.f32.mrb[0].mxu0
        %v990 = vpop.f32.mrb[0].mxu0
        %v991 = vpop.f32.mrb[0].mxu0
        %992 = vdwg.mxu0
        %994 = vrot.lane.b32.xlu0 %v988, 16
        %v995 = vpop.permute.xlu0 %994
        %vm997 = vcmask 195712
        %998 = vst.msk [vmem:[#allocation3] sm:$0xff] %vm997, %v995
        %v999 = vld [vmem:[#allocation2] sm:$0xf]
        %1000 = vrot.lane.b32.xlu0 %v757, 104
        %v1001 = vpop.permute.xlu0 %1000
        %v1003 = vunpack.c.l.b16 %v999
        %v1004 = vpack.c.b16 %v1003, %v1003
        %1005 = vrot.lane.b32.xlu0 %v1004, 72
        %v1006 = vpop.permute.xlu0 %1005
        %v1008 = vsel %vm645, %v1001, 0
        %v1011 = vsel %vm645, %v1006, 0
        %1013 = vmatprep.subr.bf16.mxu0 0
        %1014 = vmatpush1.bf16.xpose.msra.mxu0 %v1011
        %1015 = vmatprep.subr.bf16.mxu0 0
        %1016 = vmatpush1.bf16.xpose.msra.mxu0 0
        %1017 = vmatprep.subr.bf16.mxu0 0
        %1018 = vmatpush1.bf16.xpose.msra.mxu0 0
        %1019 = vmatprep.subr.bf16.mxu0 0
        %1020 = vmatpush1.bf16.xpose.msra.mxu0 0
        %1021 = vmatprep.subr.bf16.mxu0 0
        %1022 = vmatpush1.bf16.xpose.msra.mxu0 0
        %1023 = vmatprep.subr.bf16.mxu0 0
        %1024 = vmatpush1.bf16.xpose.msra.mxu0 0
        %1025 = vmatprep.subr.bf16.mxu0 0
        %1026 = vmatpush1.bf16.xpose.msra.mxu0 0
        %1027 = vmatprep.subr.bf16.mxu0 0
        %1028 = vmatpush1.bf16.xpose.msra.mxu0 0
        %1029 = vmatprep.subr.bf16.mxu0 0
        %1030 = vmatpush1.bf16.xpose.msra.mxu0 0
        %1031 = vmatprep.subr.bf16.mxu0 0
        %1032 = vmatpush1.bf16.xpose.msra.mxu0 0
        %1033 = vmatprep.subr.bf16.mxu0 0
        %1034 = vmatpush1.bf16.xpose.msra.mxu0 0
        %1035 = vmatprep.subr.bf16.mxu0 0
        %1036 = vmatpush1.bf16.xpose.msra.mxu0 0
        %1037 = vmatprep.subr.bf16.mxu0 0
        %1038 = vmatpush1.bf16.xpose.msra.mxu0 0
        %1039 = vmatprep.subr.bf16.mxu0 0
        %1040 = vmatpush1.bf16.xpose.msra.mxu0 0
        %1041 = vmatprep.subr.bf16.mxu0 0
        %1042 = vmatpush1.bf16.xpose.msra.mxu0 0
        %1043 = vmatprep.subr.bf16.mxu0 0
        %1044 = vmatpush1.bf16.xpose.msra.mxu0 0
        %1045 = vmatprep.mubr.bf16.mxu0 0
        %1046 = vmatmul.mubr.bf16.gmra.mrb[0].mxu0 %v1008
        %v1047 = vpop.f32.mrb[0].mxu0
        %v1048 = vadd.f32 0.0, %v1047
        %v1049 = vpop.f32.mrb[0].mxu0
        %v1050 = vpop.f32.mrb[0].mxu0
        %v1051 = vpop.f32.mrb[0].mxu0
        %1052 = vdwg.mxu0
        %v1053 = vsel %vm645, %v1048, -inf
        %1054 = vmax.xlane.f32.xlu0 %v1053
        %v1055 = vpop.xlane.xlu0 %1054
        %v1056 = vsub.f32 %v1048, %v1055
        %v1057 = vmul.f32 %v1056, 1.442695
        %v1058 = vpow.pop %v1057
        %v1059 = vsel %vm645, %v1058, 0.0
        %1060 = vadd.xlane.f32.xlu0 %v1059
        %v1061 = vpop.xlane.xlu0 %1060
        %v1062 = vrcp.pop %v1061
        %v1063 = vmul.f32 %v1058, %v1062
        %v1064 = vadd.f32 %v943, %v1063
        %v1065 = vpack.c.bf16 %v1063, %v1063
        %1066 = vrot.lane.b32.xlu0 %v1004, 40
        %v1067 = vpop.permute.xlu0 %1066
        %v1069 = vsel %vm645, %v1065, 0
        %v1072 = vsel %vm709, %v1067, 0
        %1074 = vmatprep.subr.bf16.mxu0 0
        %1075 = vmatpush1.bf16.msra.mxu0 %v1072
        %1076 = vmatprep.subr.bf16.mxu0 0
        %1077 = vmatpush1.bf16.msra.mxu0 0
        %1078 = vmatprep.subr.bf16.mxu0 0
        %1079 = vmatpush1.bf16.msra.mxu0 0
        %1080 = vmatprep.subr.bf16.mxu0 0
        %1081 = vmatpush1.bf16.msra.mxu0 0
        %1082 = vmatprep.subr.bf16.mxu0 0
        %1083 = vmatpush1.bf16.msra.mxu0 0
        %1084 = vmatprep.subr.bf16.mxu0 0
        %1085 = vmatpush1.bf16.msra.mxu0 0
        %1086 = vmatprep.subr.bf16.mxu0 0
        %1087 = vmatpush1.bf16.msra.mxu0 0
        %1088 = vmatprep.subr.bf16.mxu0 0
        %1089 = vmatpush1.bf16.msra.mxu0 0
        %1090 = vmatprep.subr.bf16.mxu0 0
        %1091 = vmatpush1.bf16.msra.mxu0 0
        %1092 = vmatprep.subr.bf16.mxu0 0
        %1093 = vmatpush1.bf16.msra.mxu0 0
        %1094 = vmatprep.subr.bf16.mxu0 0
        %1095 = vmatpush1.bf16.msra.mxu0 0
        %1096 = vmatprep.subr.bf16.mxu0 0
        %1097 = vmatpush1.bf16.msra.mxu0 0
        %1098 = vmatprep.subr.bf16.mxu0 0
        %1099 = vmatpush1.bf16.msra.mxu0 0
        %1100 = vmatprep.subr.bf16.mxu0 0
        %1101 = vmatpush1.bf16.msra.mxu0 0
        %1102 = vmatprep.subr.bf16.mxu0 0
        %1103 = vmatpush1.bf16.msra.mxu0 0
        %1104 = vmatprep.subr.bf16.mxu0 0
        %1105 = vmatpush1.bf16.msra.mxu0 0
        %1106 = vmatprep.mubr.bf16.mxu0 0
        %1107 = vmatmul.mubr.bf16.gmra.mrb[0].mxu0 %v1069
        %v1108 = vpop.f32.mrb[0].mxu0
        %v1109 = vadd.f32 0.0, %v1108
        %v1110 = vpop.f32.mrb[0].mxu0
        %v1111 = vpop.f32.mrb[0].mxu0
        %v1112 = vpop.f32.mrb[0].mxu0
        %1113 = vdwg.mxu0
        %1115 = vrot.lane.b32.xlu0 %v1109, 24
        %v1116 = vpop.permute.xlu0 %1115
        %vm1118 = vcmask 261312
        %1119 = vst.msk [vmem:[#allocation3] sm:$0xff] %vm1118, %v1116
        %v1120 = vld [vmem:[#allocation3] sm:$0xff]
        %v1121 = vpack.c.bf16 %v1120, %v1120
        %v1122 = vld [vmem:[#allocation9] sm:$0xf]
        %v1123 = vld [vmem:[#allocation9 + $0x4] sm:$0xf]
        %v1124 = vld [vmem:[#allocation9 + $0x8] sm:$0xf]
        %v1125 = vld [vmem:[#allocation9 + $0xc] sm:$0xf]
        %v1126 = vld [vmem:[%s4] sm:$0x1]
        %v1128 = vlaneseq
        %v1129 = vshrl.u32 %v1128, 7
        %v1130 = vsub.s32 0, %v1129
        %v1131 = vrot.slane %v1126, %v1130
        %v1137 = vunpack.c.l.b16 %v1122
        %v1138 = vunpack.c.l.b16 %v1123
        %v1139 = vunpack.c.l.b16 %v1124
        %v1140 = vunpack.c.l.b16 %v1125
        %v1141 = vpack.c.b16 %v1138, %v1137
        %v1142 = vpack.c.b16 %v1140, %v1139
        %vm1145 = vcmask 261120
        %v1147 = vsel %vm1145, %v1121, 0
        %1149 = vmatprep.subr.bf16.mxu0 0
        %1150 = vmatpush1.bf16.msra.mxu0 %v1141
        %1151 = vmatprep.subr.bf16.mxu0 0
        %1152 = vmatpush1.bf16.msra.mxu0 %v1142
        %1153 = vmatprep.subr.bf16.mxu0 0
        %1154 = vmatpush1.bf16.msra.mxu0 0
        %1155 = vmatprep.subr.bf16.mxu0 0
        %1156 = vmatpush1.bf16.msra.mxu0 0
        %1157 = vmatprep.subr.bf16.mxu0 0
        %1158 = vmatpush1.bf16.msra.mxu0 0
        %1159 = vmatprep.subr.bf16.mxu0 0
        %1160 = vmatpush1.bf16.msra.mxu0 0
        %1161 = vmatprep.subr.bf16.mxu0 0
        %1162 = vmatpush1.bf16.msra.mxu0 0
        %1163 = vmatprep.subr.bf16.mxu0 0
        %1164 = vmatpush1.bf16.msra.mxu0 0
        %1165 = vmatprep.subr.bf16.mxu0 0
        %1166 = vmatpush1.bf16.msra.mxu0 0
        %1167 = vmatprep.subr.bf16.mxu0 0
        %1168 = vmatpush1.bf16.msra.mxu0 0
        %1169 = vmatprep.subr.bf16.mxu0 0
        %1170 = vmatpush1.bf16.msra.mxu0 0
        %1171 = vmatprep.subr.bf16.mxu0 0
        %1172 = vmatpush1.bf16.msra.mxu0 0
        %1173 = vmatprep.subr.bf16.mxu0 0
        %1174 = vmatpush1.bf16.msra.mxu0 0
        %1175 = vmatprep.subr.bf16.mxu0 0
        %1176 = vmatpush1.bf16.msra.mxu0 0
        %1177 = vmatprep.subr.bf16.mxu0 0
        %1178 = vmatpush1.bf16.msra.mxu0 0
        %1179 = vmatprep.subr.bf16.mxu0 0
        %1180 = vmatpush1.bf16.msra.mxu0 0
        %1181 = vmatprep.mubr.bf16.mxu0 0
        %1182 = vmatmul.mubr.bf16.gmra.mrb[0].mxu0 %v1147
        %v1183 = vpop.f32.mrb[0].mxu0
        %v1184 = vadd.f32 %v1131, %v1183
        %v1185 = vpop.f32.mrb[0].mxu0
        %v1186 = vpop.f32.mrb[0].mxu0
        %v1187 = vpop.f32.mrb[0].mxu0
        %1188 = vdwg.mxu0
        %v1189 = vadd.f32 %v633, %v1184
        %v1190 = vld [vmem:[%s9] sm:$0x1]
        %v1191 = vld [vmem:[%s10] sm:$0x1]
        %v1192 = vsel %vm1145, %v1189, 0.0
        %1193 = vadd.xlane.f32.xlu0 %v1192
        %v1194 = vpop.xlane.xlu0 %1193
        %v1195 = vrcp.pop 32.0
        %v1196 = vmul.f32 %v1194, %v1195
        %v1197 = vsub.f32 %v1189, %v1196
        %v1198 = vmul.f32 %v1197, %v1197
        %v1199 = vsel %vm1145, %v1198, 0.0
        %1200 = vadd.xlane.f32.xlu0 %v1199
        %v1201 = vpop.xlane.xlu0 %1200
        %v1202 = vmul.f32 %v1201, %v1195
        %v1203 = vadd.f32 %v1202, 1e-05
        %v1204 = vrsqrt.pop %v1203
        %v1205 = vmul.f32 %v1197, %v1204
        %v1207 = vlaneseq
        %v1208 = vshrl.u32 %v1207, 7
        %v1209 = vsub.s32 0, %v1208
        %v1210 = vrot.slane %v1190, %v1209
        %v1212 = vmul.f32 %v1205, %v1210
        %v1214 = vlaneseq
        %v1215 = vshrl.u32 %v1214, 7
        %v1216 = vsub.s32 0, %v1215
        %v1217 = vrot.slane %v1191, %v1216
        %v1219 = vadd.f32 %v1212, %v1217
        %v1220 = vpack.c.bf16 %v1219, %v1219
        %v1221 = vld [vmem:[%s5] sm:$0xf]
        %v1222 = vld [vmem:[%s5 + $0x4] sm:$0xf]
        %v1223 = vld [vmem:[%s5 + $0x8] sm:$0xf]
        %v1224 = vld [vmem:[%s5 + $0xc] sm:$0xf]
        %v1225 = vld [vmem:[%s6] sm:$0x1]
        %v1227 = vlaneseq
        %v1228 = vshrl.u32 %v1227, 7
        %v1229 = vsub.s32 0, %v1228
        %v1230 = vrot.slane %v1225, %v1229
        %v1236 = vunpack.c.l.b16 %v1221
        %v1237 = vunpack.c.l.b16 %v1222
        %v1238 = vunpack.c.l.b16 %v1223
        %v1239 = vunpack.c.l.b16 %v1224
        %v1240 = vpack.c.b16 %v1237, %v1236
        %v1241 = vpack.c.b16 %v1239, %v1238
        %v1245 = vsel %vm1145, %v1220, 0
        %1247 = vmatprep.subr.bf16.mxu0 0
        %1248 = vmatpush1.bf16.msra.mxu0 %v1240
        %1249 = vmatprep.subr.bf16.mxu0 0
        %1250 = vmatpush1.bf16.msra.mxu0 %v1241
        %1251 = vmatprep.subr.bf16.mxu0 0
        %1252 = vmatpush1.bf16.msra.mxu0 0
        %1253 = vmatprep.subr.bf16.mxu0 0
        %1254 = vmatpush1.bf16.msra.mxu0 0
        %1255 = vmatprep.subr.bf16.mxu0 0
        %1256 = vmatpush1.bf16.msra.mxu0 0
        %1257 = vmatprep.subr.bf16.mxu0 0
        %1258 = vmatpush1.bf16.msra.mxu0 0
        %1259 = vmatprep.subr.bf16.mxu0 0
        %1260 = vmatpush1.bf16.msra.mxu0 0
        %1261 = vmatprep.subr.bf16.mxu0 0
        %1262 = vmatpush1.bf16.msra.mxu0 0
        %1263 = vmatprep.subr.bf16.mxu0 0
        %1264 = vmatpush1.bf16.msra.mxu0 0
        %1265 = vmatprep.subr.bf16.mxu0 0
        %1266 = vmatpush1.bf16.msra.mxu0 0
        %1267 = vmatprep.subr.bf16.mxu0 0
        %1268 = vmatpush1.bf16.msra.mxu0 0
        %1269 = vmatprep.subr.bf16.mxu0 0
        %1270 = vmatpush1.bf16.msra.mxu0 0
        %1271 = vmatprep.subr.bf16.mxu0 0
        %1272 = vmatpush1.bf16.msra.mxu0 0
        %1273 = vmatprep.subr.bf16.mxu0 0
        %1274 = vmatpush1.bf16.msra.mxu0 0
        %1275 = vmatprep.subr.bf16.mxu0 0
        %1276 = vmatpush1.bf16.msra.mxu0 0
        %1277 = vmatprep.subr.bf16.mxu0 0
        %1278 = vmatpush1.bf16.msra.mxu0 0
        %1279 = vmatprep.mubr.bf16.mxu0 0
        %1280 = vmatmul.mubr.bf16.gmra.mrb[0].mxu0 %v1245
        %v1281 = vpop.f32.mrb[0].mxu0
        %v1282 = vadd.f32 %v1230, %v1281
        %v1283 = vpop.f32.mrb[0].mxu0
        %v1284 = vpop.f32.mrb[0].mxu0
        %v1285 = vpop.f32.mrb[0].mxu0
        %1286 = vdwg.mxu0
        %v1287 = vmax.f32 %v1282, 0.0
        %v1288 = vpack.c.bf16 %v1287, %v1287
        %v1289 = vld [vmem:[#allocation10] sm:$0xf]
        %v1290 = vld [vmem:[#allocation10 + $0x4] sm:$0xf]
        %v1291 = vld [vmem:[#allocation10 + $0x8] sm:$0xf]
        %v1292 = vld [vmem:[#allocation10 + $0xc] sm:$0xf]
        %v1293 = vld [vmem:[%s8] sm:$0x1]
        %v1295 = vlaneseq
        %v1296 = vshrl.u32 %v1295, 7
        %v1297 = vsub.s32 0, %v1296
        %v1298 = vrot.slane %v1293, %v1297
        %v1304 = vunpack.c.l.b16 %v1289
        %v1305 = vunpack.c.l.b16 %v1290
        %v1306 = vunpack.c.l.b16 %v1291
        %v1307 = vunpack.c.l.b16 %v1292
        %v1308 = vpack.c.b16 %v1305, %v1304
        %v1309 = vpack.c.b16 %v1307, %v1306
        %v1313 = vsel %vm1145, %v1288, 0
        %1315 = vmatprep.subr.bf16.mxu0 0
        %1316 = vmatpush1.bf16.msra.mxu0 %v1308
        %1317 = vmatprep.subr.bf16.mxu0 0
        %1318 = vmatpush1.bf16.msra.mxu0 %v1309
        %1319 = vmatprep.subr.bf16.mxu0 0
        %1320 = vmatpush1.bf16.msra.mxu0 0
        %1321 = vmatprep.subr.bf16.mxu0 0
        %1322 = vmatpush1.bf16.msra.mxu0 0
        %1323 = vmatprep.subr.bf16.mxu0 0
        %1324 = vmatpush1.bf16.msra.mxu0 0
        %1325 = vmatprep.subr.bf16.mxu0 0
        %1326 = vmatpush1.bf16.msra.mxu0 0
        %1327 = vmatprep.subr.bf16.mxu0 0
        %1328 = vmatpush1.bf16.msra.mxu0 0
        %1329 = vmatprep.subr.bf16.mxu0 0
        %1330 = vmatpush1.bf16.msra.mxu0 0
        %1331 = vmatprep.subr.bf16.mxu0 0
        %1332 = vmatpush1.bf16.msra.mxu0 0
        %1333 = vmatprep.subr.bf16.mxu0 0
        %1334 = vmatpush1.bf16.msra.mxu0 0
        %1335 = vmatprep.subr.bf16.mxu0 0
        %1336 = vmatpush1.bf16.msra.mxu0 0
        %1337 = vmatprep.subr.bf16.mxu0 0
        %1338 = vmatpush1.bf16.msra.mxu0 0
        %1339 = vmatprep.subr.bf16.mxu0 0
        %1340 = vmatpush1.bf16.msra.mxu0 0
        %1341 = vmatprep.subr.bf16.mxu0 0
        %1342 = vmatpush1.bf16.msra.mxu0 0
        %1343 = vmatprep.subr.bf16.mxu0 0
        %1344 = vmatpush1.bf16.msra.mxu0 0
        %1345 = vmatprep.subr.bf16.mxu0 0
        %1346 = vmatpush1.bf16.msra.mxu0 0
        %1347 = vmatprep.mubr.bf16.mxu0 0
        %1348 = vmatmul.mubr.bf16.gmra.mrb[0].mxu0 %v1313
        %v1349 = vpop.f32.mrb[0].mxu0
        %v1350 = vadd.f32 %v1298, %v1349
        %v1351 = vpop.f32.mrb[0].mxu0
        %v1352 = vpop.f32.mrb[0].mxu0
        %v1353 = vpop.f32.mrb[0].mxu0
        %1354 = vdwg.mxu0
        %v1355 = vadd.f32 %v1219, %v1350
        %v1356 = vld [vmem:[%s11] sm:$0x1]
        %v1357 = vld [vmem:[%s12] sm:$0x1]
        %v1358 = vsel %vm1145, %v1355, 0.0
        %1359 = vadd.xlane.f32.xlu0 %v1358
        %v1360 = vpop.xlane.xlu0 %1359
        %v1361 = vmul.f32 %v1360, %v1195
        %v1362 = vsub.f32 %v1355, %v1361
        %v1363 = vmul.f32 %v1362, %v1362
        %v1364 = vsel %vm1145, %v1363, 0.0
        %1365 = vadd.xlane.f32.xlu0 %v1364
        %v1366 = vpop.xlane.xlu0 %1365
        %v1367 = vmul.f32 %v1366, %v1195
        %v1368 = vadd.f32 %v1367, 1e-05
        %v1369 = vrsqrt.pop %v1368
        %v1370 = vmul.f32 %v1362, %v1369
        %v1372 = vlaneseq
        %v1373 = vshrl.u32 %v1372, 7
        %v1374 = vsub.s32 0, %v1373
        %v1375 = vrot.slane %v1356, %v1374
        %v1377 = vmul.f32 %v1370, %v1375
        %v1379 = vlaneseq
        %v1380 = vshrl.u32 %v1379, 7
        %v1381 = vsub.s32 0, %v1380
        %v1382 = vrot.slane %v1357, %v1381
        %v1384 = vadd.f32 %v1377, %v1382
        %1385 = vst.msk [vmem:[%s546] sm:$0xff] %vm1145, %v1384
        %v1386 = vmul.f32 %v1064, 0.25
        %1387 = vst.msk [vmem:[%s553] sm:$0xff] %vm645, %v1386
        %s1388 = sand.u32 %s337, 1
        %s1389 = scalar_lea.sflag [#allocation6], %s1388
        %s1390 = sand.u32 %s337, 1
        %s1391 = smul.addr %s1390, 8
        %s1392 = scalar_lea.vmem [#allocation12], %s1391
        %s1393 = sand.u32 %s365, 1
        %s1394 = scalar_lea.sflag [#allocation14], %s1393
        %s1395 = sand.u32 %s365, 1
        %s1396 = smul.addr %s1395, 8
        %s1397 = scalar_lea.vmem [#allocation13], %s1396
        // Predicated region
        $region93: #{tpu_custom_call.1} parent=71 // pred_check
          %p1398 = pneg %p347
        $region94: #{tpu_custom_call.1} parent=71 // pred_check_branch
          %1400 = sbr.rel (%p1398) target = $region96
        $region95: #{tpu_custom_call.1} parent=71 // pred_region
          %s1402 = ssub.s32 128, 128
          %1403 = vsyncadd %s1389, %s1402
          %s1404 = sadd.s32 %s42, %s41
          %s1405 = smul.addr %s1404, 128
          %s1406 = scalar_lea.hbm %s13, %s1405
          %s1408 = sshll.u32 %s1392, 4
          %s1409 = int_to_ptr.vmem [resolvable:$true] %s1408
          %1411 = dma.vmem_to_hbm [thread:$0]  %s1409, 128, %s1406, %s1389
        $region96: #{tpu_custom_call.1} parent=71 // pred_fallthru
          _
        // Predicated region
        $region97: #{tpu_custom_call.1} parent=71 // pred_check
          %p1412 = pneg %p375
        $region98: #{tpu_custom_call.1} parent=71 // pred_check_branch
          %1414 = sbr.rel (%p1412) target = $region100
        $region99: #{tpu_custom_call.1} parent=71 // pred_region
          %s1416 = ssub.s32 128, 128
          %1417 = vsyncadd %s1394, %s1416
          %s1418 = sadd.s32 %s42, %s41
          %s1419 = smul.addr %s1418, 128
          %s1420 = scalar_lea.hbm %s14, %s1419
          %s1422 = sshll.u32 %s1397, 4
          %s1423 = int_to_ptr.vmem [resolvable:$true] %s1422
          %1425 = dma.vmem_to_hbm [thread:$0]  %s1423, 128, %s1420, %s1394
        $region100: #{tpu_custom_call.1} parent=71 // pred_fallthru
          _
      $region72: #{tpu_custom_call.1} parent=5 // pred_fallthru
        _
      %p1426 = scmp.le.s32.totalorder 2, %s32
      // Predicated region
      $region101: #{tpu_custom_call.1} parent=5 // pred_check
        %p1427 = pneg %p1426
      $region102: #{tpu_custom_call.1} parent=5 // pred_check_branch
        %1429 = sbr.rel (%p1427) target = $region104
      $region103: #{tpu_custom_call.1} parent=5 // pred_region
        %s1430 = ssub.s32 %s32, 2
        // Predicated region
        $region105: #{tpu_custom_call.1} parent=103 // pred_check
          %p1431 = pneg %p353
        $region106: #{tpu_custom_call.1} parent=103 // pred_check_branch
          %1433 = sbr.rel (%p1431) target = $region108
        $region107: #{tpu_custom_call.1} parent=103 // pred_region
          %s1434 = sand.u32 %s338, 1
          %s1435 = scalar_lea.sflag [#allocation6], %s1434
          %s1436 = sand.u32 %s338, 1
          %s1437 = smul.addr %s1436, 8
          %s1438 = scalar_lea.vmem [#allocation12], %s1437
          %1439 = dma.done %s1435, 128
        $region108: #{tpu_custom_call.1} parent=103 // pred_fallthru
          _
        // Predicated region
        $region109: #{tpu_custom_call.1} parent=103 // pred_check
          %p1440 = pneg %p381
        $region110: #{tpu_custom_call.1} parent=103 // pred_check_branch
          %1442 = sbr.rel (%p1440) target = $region112
        $region111: #{tpu_custom_call.1} parent=103 // pred_region
          %s1443 = sand.u32 %s366, 1
          %s1444 = scalar_lea.sflag [#allocation14], %s1443
          %s1445 = sand.u32 %s366, 1
          %s1446 = smul.addr %s1445, 8
          %s1447 = scalar_lea.vmem [#allocation13], %s1446
          %1448 = dma.done %s1444, 128
        $region112: #{tpu_custom_call.1} parent=103 // pred_fallthru
          _
      $region104: #{tpu_custom_call.1} parent=5 // pred_fallthru
        _
    $region6: #{tpu_custom_call.1} parent=1 // loop_footer
      %s36 = sadd.s32 1, %s32
    $region7: #{tpu_custom_call.1} parent=1 // loop_footer_branch
      %31 = sbr.rel target = $region3
    $region8: #{tpu_custom_call.1} parent=1 // loop_exit
      _
    %1449 = vsyncpa [#allocation5], 1
    %s1450 = scalar_lea.sflag [#allocation5], 1
    %1451 = vsyncpa %s1450, 1
    %1452 = vsyncpa [#allocation8], 1
    %1453 = vsyncpa [#allocation11], 1
    %1454 = vsyncpa [#allocation6], 1
    %s1455 = scalar_lea.sflag [#allocation6], 1
    %1456 = vsyncpa %s1455, 1
    %1457 = vsyncpa [#allocation14], 1
    %s1458 = scalar_lea.sflag [#allocation14], 1
    %1459 = vsyncpa %s1458, 1

</llo_original>
